<compile_context>
chip_gen: v6e
topology: v6e:2x2x1
jax: 0.10.0
libtpu: 0.0.40
codegen_flags: <defaults>
</compile_context>

<pallas_src>
import functools

import jax
import jax.numpy as jnp
import numpy as np
from jax.experimental import pallas as pl
from jax.experimental.pallas import tpu as pltpu


# ----------------------------------------------------------------------------
# In-kernel helpers (operate on (C, L) slabs, L = H*W on the lane axis)
# ----------------------------------------------------------------------------
def _shift_flat(x, delta):
    """out[:, j] = x[:, j + delta], zero-filled outside [0, L).  `delta` static."""
    c, l = x.shape
    if delta == 0:
        return x
    z = jnp.zeros((c, abs(delta)), x.dtype)
    if delta > 0:
        return jnp.concatenate([x[:, delta:], z], axis=1)
    return jnp.concatenate([z, x[:, :l + delta]], axis=1)


def _conv_w_flat(x, wmat, bias, wmask, k):
    """(1, k) conv along W on a (C, H*W) slab.

    wmat:  (Cout, k*C)  tap-major folded weights
    bias:  (Cout, 1)
    wmask: (k, L)       0/1 masks killing taps that cross a row boundary
    """
    pad = k // 2
    slabs = []
    for t in range(k):                               # static, unrolled
        s = _shift_flat(x, t - pad)                  # flat shift (may cross rows)
        slabs.append(s * wmask[t:t + 1, :])          # zero row-crossing positions
    cols = jnp.concatenate(slabs, axis=0)            # (k*C, L) im2col, tap-major
    y = jax.lax.dot_general(wmat, cols, (((1,), (0,)), ((), ())),
                            preferred_element_type=jnp.float32)
    return y + bias                                  # (Cout, L)


def _conv_h_flat(x, wmat, bias, w, k):
    """(k, 1) conv along H on a (C, H*W) slab: whole-row flat shifts, no mask."""
    pad = k // 2
    slabs = [_shift_flat(x, (t - pad) * w) for t in range(k)]
    cols = jnp.concatenate(slabs, axis=0)            # (k*C, L)
    y = jax.lax.dot_general(wmat, cols, (((1,), (0,)), ((), ())),
                            preferred_element_type=jnp.float32)
    return y + bias


def _gcn_kernel(x_ref, wl1_ref, bl1_ref, wl2_ref, bl2_ref,
                wr1_ref, br1_ref, wr2_ref, br2_ref, wmask_ref, o_ref, *, w, k):
    x = x_ref[...]                  # (Cin, L) float32
    wmask = wmask_ref[...]          # (k, L)   float32 0/1 row-boundary masks

    left = _conv_w_flat(x, wl1_ref[...], bl1_ref[...], wmask, k)        # (1,k)
    left = _conv_h_flat(left, wl2_ref[...], bl2_ref[...], w, k)         # (k,1)

    right = _conv_h_flat(x, wr1_ref[...], br1_ref[...], w, k)           # (k,1)
    right = _conv_w_flat(right, wr2_ref[...], br2_ref[...], wmask, k)   # (1,k)

    o_ref[...] = (left + right).astype(o_ref.dtype)


# ----------------------------------------------------------------------------
# Wrapper: weight folding, mask precompute, gridded pallas_call
# ----------------------------------------------------------------------------
def _taps_matrix_w(w_oihw):   # (O, I, 1, K) -> (O, K*I), row index = t*I + i
    o, i, _, kk = w_oihw.shape
    return jnp.transpose(w_oihw[:, :, 0, :], (0, 2, 1)).reshape(o, kk * i)


def _taps_matrix_h(w_oihw):   # (O, I, K, 1) -> (O, K*I), row index = t*I + i
    o, i, kk, _ = w_oihw.shape
    return jnp.transpose(w_oihw[:, :, :, 0], (0, 2, 1)).reshape(o, kk * i)


@jax.jit
def gcn_forward(params, x_nchw):
    """x_nchw: (N, Cin, H, W) float32 -> (N, Cout, H, W) float32."""
    n, cin, h, w = x_nchw.shape
    wl1, bl1 = params["conv_l1"]
    wl2, bl2 = params["conv_l2"]
    wr1, br1 = params["conv_r1"]
    wr2, br2 = params["conv_r2"]
    cout = wl1.shape[0]
    k = wl1.shape[3]
    pad = k // 2
    hw = h * w

    # Fold the K taps into single contraction matrices; biases as (Cout, 1).
    wm_l1 = _taps_matrix_w(wl1)
    wm_l2 = _taps_matrix_h(wl2)
    wm_r1 = _taps_matrix_h(wr1)
    wm_r2 = _taps_matrix_w(wr2)
    b_l1 = bl1.reshape(cout, 1)
    b_l2 = bl2.reshape(cout, 1)
    b_r1 = br1.reshape(cout, 1)
    b_r2 = br2.reshape(cout, 1)

    # Row-boundary masks for the W-axis taps: tap t reads column w + (t - pad).
    w_idx = jnp.arange(hw, dtype=jnp.int32) % w               # (L,)
    offs = jnp.arange(k, dtype=jnp.int32)[:, None] - pad       # (k, 1)
    wmask = ((w_idx[None, :] + offs >= 0) &
             (w_idx[None, :] + offs < w)).astype(x_nchw.dtype)  # (k, L)

    # NCHW -> (N, C, H*W): contiguous trailing-dims reshape, no HBM copy.
    x_flat = x_nchw.reshape(n, cin, hw)

    resident = lambda i: (0, 0)   # small operands: constant block, stay in VMEM

    out_flat = pl.pallas_call(
        functools.partial(_gcn_kernel, w=w, k=k),
        out_shape=jax.ShapeDtypeStruct((n, cout, hw), x_nchw.dtype),
        grid=(n,),
        in_specs=[
            pl.BlockSpec((None, cin, hw), lambda i: (i, 0, 0)),
            pl.BlockSpec(wm_l1.shape, resident), pl.BlockSpec(b_l1.shape, resident),
            pl.BlockSpec(wm_l2.shape, resident), pl.BlockSpec(b_l2.shape, resident),
            pl.BlockSpec(wm_r1.shape, resident), pl.BlockSpec(b_r1.shape, resident),
            pl.BlockSpec(wm_r2.shape, resident), pl.BlockSpec(b_r2.shape, resident),
            pl.BlockSpec(wmask.shape, resident),
        ],
        out_specs=pl.BlockSpec((None, cout, hw), lambda i: (i, 0, 0)),
        compiler_params=pltpu.CompilerParams(
            dimension_semantics=("parallel",),
            vmem_limit_bytes=32 * 1024 * 1024),
    )(x_flat, wm_l1, b_l1, wm_l2, b_l2, wm_r1, b_r1, wm_r2, b_r2, wmask)

    return out_flat.reshape(n, cout, h, w)


# ----------------------------------------------------------------------------
# Parameters (kept as PyTorch OIHW conv weights) and pure-JAX reference
# ----------------------------------------------------------------------------
def init_gcn_params(key, in_channels, out_channels, kernel_size=9):
    ks = jax.random.split(key, 8)
    k = kernel_size

    def conv_init(kw, kb, shape):
        fan_in = shape[1] * shape[2] * shape[3]
        bound = 1.0 / np.sqrt(fan_in)
        w = jax.random.uniform(kw, shape, jnp.float32, -bound, bound)
        b = jax.random.uniform(kb, (shape[0],), jnp.float32, -bound, bound)
        return w, b

    return {
        "conv_l1": conv_init(ks[0], ks[1], (out_channels, in_channels, 1, k)),
        "conv_l2": conv_init(ks[2], ks[3], (out_channels, out_channels, k, 1)),
        "conv_r1": conv_init(ks[4], ks[5], (out_channels, in_channels, k, 1)),
        "conv_r2": conv_init(ks[6], ks[7], (out_channels, out_channels, 1, k)),
    }


def _ref_conv2d(x, w, b, padding):
    out = jax.lax.conv_general_dilated(
        x, w, window_strides=(1, 1),
        padding=((padding[0], padding[0]), (padding[1], padding[1])),
        dimension_numbers=("NCHW", "OIHW", "NCHW"))
    return out + b[None, :, None, None]


def gcn_forward_ref(params, x, kernel_size=9):
    p = kernel_size // 2
    wl1, bl1 = params["conv_l1"]
    wl2, bl2 = params["conv_l2"]
    wr1, br1 = params["conv_r1"]
    wr2, br2 = params["conv_r2"]
    left = _ref_conv2d(x, wl1, bl1, (0, p))
    left = _ref_conv2d(left, wl2, bl2, (p, 0))
    right = _ref_conv2d(x, wr1, br1, (p, 0))
    right = _ref_conv2d(right, wr2, br2, (0, p))
    return left + right


# ----------------------------------------------------------------------------
if __name__ == "__main__":
    key = jax.random.PRNGKey(0)
    k_param, k_x = jax.random.split(key)

    in_channels, out_channels, kernel_size = 4, 8, 9
    N, H, W = 2, 16, 16

    params = init_gcn_params(k_param, in_channels, out_channels, kernel_size)
    x = jax.random.normal(k_x, (N, in_channels, H, W), jnp.float32)

    out = gcn_forward(params, x)
    out = jax.block_until_ready(out)

    ref = gcn_forward_ref(params, x, kernel_size)
    np.testing.assert_allclose(np.asarray(out), np.asarray(ref),
                               rtol=1e-4, atol=1e-4)
    assert out.shape == (N, out_channels, H, W)

    print("KERNEL_OK")
</pallas_src>

<mosaic_0001>
module attributes {stable_mosaic.version = 11 : i64} {
  func.func @_gcn_kernel(%arg0: i32, %arg1: memref<1x4x256xf32, #tpu.memory_space<vmem>>, %arg2: memref<8x36xf32, #tpu.memory_space<vmem>>, %arg3: memref<8x1xf32, #tpu.memory_space<vmem>>, %arg4: memref<8x72xf32, #tpu.memory_space<vmem>>, %arg5: memref<8x1xf32, #tpu.memory_space<vmem>>, %arg6: memref<8x36xf32, #tpu.memory_space<vmem>>, %arg7: memref<8x1xf32, #tpu.memory_space<vmem>>, %arg8: memref<8x72xf32, #tpu.memory_space<vmem>>, %arg9: memref<8x1xf32, #tpu.memory_space<vmem>>, %arg10: memref<9x256xf32, #tpu.memory_space<vmem>>, %arg11: memref<1x8x256xf32, #tpu.memory_space<vmem>>) attributes {dimension_semantics = [#tpu.dimension_semantics<parallel>], iteration_bounds = array<i64: 2>, scalar_prefetch = 0 : i64, scratch_operands = 0 : i64, tpu.core_type = #tpu.core_type<tc>, window_params = [{transform_indices = @transform_0, window_bounds = array<i64: 1, 4, 256>}, {pipeline_mode = #tpu.pipeline_mode<synchronous>, transform_indices = @transform_1, window_bounds = array<i64: 8, 36>}, {pipeline_mode = #tpu.pipeline_mode<synchronous>, transform_indices = @transform_2, window_bounds = array<i64: 8, 1>}, {pipeline_mode = #tpu.pipeline_mode<synchronous>, transform_indices = @transform_3, window_bounds = array<i64: 8, 72>}, {pipeline_mode = #tpu.pipeline_mode<synchronous>, transform_indices = @transform_4, window_bounds = array<i64: 8, 1>}, {pipeline_mode = #tpu.pipeline_mode<synchronous>, transform_indices = @transform_5, window_bounds = array<i64: 8, 36>}, {pipeline_mode = #tpu.pipeline_mode<synchronous>, transform_indices = @transform_6, window_bounds = array<i64: 8, 1>}, {pipeline_mode = #tpu.pipeline_mode<synchronous>, transform_indices = @transform_7, window_bounds = array<i64: 8, 72>}, {pipeline_mode = #tpu.pipeline_mode<synchronous>, transform_indices = @transform_8, window_bounds = array<i64: 8, 1>}, {pipeline_mode = #tpu.pipeline_mode<synchronous>, transform_indices = @transform_9, window_bounds = array<i64: 9, 256>}, {transform_indices = @transform_10, window_bounds = array<i64: 1, 8, 256>}]} {
    %c0 = arith.constant 0 : index
    %c0_0 = arith.constant 0 : index
    %c0_1 = arith.constant 0 : index
    %0 = vector.load %arg1[%c0, %c0_0, %c0_1] : memref<1x4x256xf32, #tpu.memory_space<vmem>>, vector<1x4x256xf32>
    %1 = vector.shape_cast %0 : vector<1x4x256xf32> to vector<4x256xf32>
    %c0_2 = arith.constant 0 : index
    %c0_3 = arith.constant 0 : index
    %2 = vector.load %arg10[%c0_2, %c0_3] : memref<9x256xf32, #tpu.memory_space<vmem>>, vector<9x256xf32>
    %c0_4 = arith.constant 0 : index
    %c0_5 = arith.constant 0 : index
    %3 = vector.load %arg2[%c0_4, %c0_5] : memref<8x36xf32, #tpu.memory_space<vmem>>, vector<8x36xf32>
    %c0_6 = arith.constant 0 : index
    %c0_7 = arith.constant 0 : index
    %4 = vector.load %arg3[%c0_6, %c0_7] : memref<8x1xf32, #tpu.memory_space<vmem>>, vector<8x1xf32>
    %cst = arith.constant 0.000000e+00 : f32
    %5 = vector.broadcast %cst : f32 to vector<4x4xf32>
    %6 = vector.extract_strided_slice %1 {offsets = [0, 0], sizes = [4, 252], strides = [1, 1]} : vector<4x256xf32> to vector<4x252xf32>
    %7 = tpu.concatenate %5, %6 in 1 : vector<4x4xf32>, vector<4x252xf32> -> vector<4x256xf32>
    %8 = vector.extract_strided_slice %2 {offsets = [0, 0], sizes = [1, 256], strides = [1, 1]} : vector<9x256xf32> to vector<1x256xf32>
    %9 = vector.broadcast %8 : vector<1x256xf32> to vector<4x256xf32>
    %10 = arith.mulf %7, %9 : vector<4x256xf32>
    %cst_8 = arith.constant 0.000000e+00 : f32
    %11 = vector.broadcast %cst_8 : f32 to vector<4x3xf32>
    %12 = vector.extract_strided_slice %1 {offsets = [0, 0], sizes = [4, 253], strides = [1, 1]} : vector<4x256xf32> to vector<4x253xf32>
    %13 = tpu.concatenate %11, %12 in 1 : vector<4x3xf32>, vector<4x253xf32> -> vector<4x256xf32>
    %14 = vector.extract_strided_slice %2 {offsets = [1, 0], sizes = [1, 256], strides = [1, 1]} : vector<9x256xf32> to vector<1x256xf32>
    %15 = vector.broadcast %14 : vector<1x256xf32> to vector<4x256xf32>
    %16 = arith.mulf %13, %15 : vector<4x256xf32>
    %cst_9 = arith.constant 0.000000e+00 : f32
    %17 = vector.broadcast %cst_9 : f32 to vector<4x2xf32>
    %18 = vector.extract_strided_slice %1 {offsets = [0, 0], sizes = [4, 254], strides = [1, 1]} : vector<4x256xf32> to vector<4x254xf32>
    %19 = tpu.concatenate %17, %18 in 1 : vector<4x2xf32>, vector<4x254xf32> -> vector<4x256xf32>
    %20 = vector.extract_strided_slice %2 {offsets = [2, 0], sizes = [1, 256], strides = [1, 1]} : vector<9x256xf32> to vector<1x256xf32>
    %21 = vector.broadcast %20 : vector<1x256xf32> to vector<4x256xf32>
    %22 = arith.mulf %19, %21 : vector<4x256xf32>
    %cst_10 = arith.constant 0.000000e+00 : f32
    %23 = vector.broadcast %cst_10 : f32 to vector<4x1xf32>
    %24 = vector.extract_strided_slice %1 {offsets = [0, 0], sizes = [4, 255], strides = [1, 1]} : vector<4x256xf32> to vector<4x255xf32>
    %25 = tpu.concatenate %23, %24 in 1 : vector<4x1xf32>, vector<4x255xf32> -> vector<4x256xf32>
    %26 = vector.extract_strided_slice %2 {offsets = [3, 0], sizes = [1, 256], strides = [1, 1]} : vector<9x256xf32> to vector<1x256xf32>
    %27 = vector.broadcast %26 : vector<1x256xf32> to vector<4x256xf32>
    %28 = arith.mulf %25, %27 : vector<4x256xf32>
    %29 = vector.extract_strided_slice %2 {offsets = [4, 0], sizes = [1, 256], strides = [1, 1]} : vector<9x256xf32> to vector<1x256xf32>
    %30 = vector.broadcast %29 : vector<1x256xf32> to vector<4x256xf32>
    %31 = arith.mulf %1, %30 : vector<4x256xf32>
    %cst_11 = arith.constant 0.000000e+00 : f32
    %32 = vector.broadcast %cst_11 : f32 to vector<4x1xf32>
    %33 = vector.extract_strided_slice %1 {offsets = [0, 1], sizes = [4, 255], strides = [1, 1]} : vector<4x256xf32> to vector<4x255xf32>
    %34 = tpu.concatenate %33, %32 in 1 : vector<4x255xf32>, vector<4x1xf32> -> vector<4x256xf32>
    %35 = vector.extract_strided_slice %2 {offsets = [5, 0], sizes = [1, 256], strides = [1, 1]} : vector<9x256xf32> to vector<1x256xf32>
    %36 = vector.broadcast %35 : vector<1x256xf32> to vector<4x256xf32>
    %37 = arith.mulf %34, %36 : vector<4x256xf32>
    %cst_12 = arith.constant 0.000000e+00 : f32
    %38 = vector.broadcast %cst_12 : f32 to vector<4x2xf32>
    %39 = vector.extract_strided_slice %1 {offsets = [0, 2], sizes = [4, 254], strides = [1, 1]} : vector<4x256xf32> to vector<4x254xf32>
    %40 = tpu.concatenate %39, %38 in 1 : vector<4x254xf32>, vector<4x2xf32> -> vector<4x256xf32>
    %41 = vector.extract_strided_slice %2 {offsets = [6, 0], sizes = [1, 256], strides = [1, 1]} : vector<9x256xf32> to vector<1x256xf32>
    %42 = vector.broadcast %41 : vector<1x256xf32> to vector<4x256xf32>
    %43 = arith.mulf %40, %42 : vector<4x256xf32>
    %cst_13 = arith.constant 0.000000e+00 : f32
    %44 = vector.broadcast %cst_13 : f32 to vector<4x3xf32>
    %45 = vector.extract_strided_slice %1 {offsets = [0, 3], sizes = [4, 253], strides = [1, 1]} : vector<4x256xf32> to vector<4x253xf32>
    %46 = tpu.concatenate %45, %44 in 1 : vector<4x253xf32>, vector<4x3xf32> -> vector<4x256xf32>
    %47 = vector.extract_strided_slice %2 {offsets = [7, 0], sizes = [1, 256], strides = [1, 1]} : vector<9x256xf32> to vector<1x256xf32>
    %48 = vector.broadcast %47 : vector<1x256xf32> to vector<4x256xf32>
    %49 = arith.mulf %46, %48 : vector<4x256xf32>
    %cst_14 = arith.constant 0.000000e+00 : f32
    %50 = vector.broadcast %cst_14 : f32 to vector<4x4xf32>
    %51 = vector.extract_strided_slice %1 {offsets = [0, 4], sizes = [4, 252], strides = [1, 1]} : vector<4x256xf32> to vector<4x252xf32>
    %52 = tpu.concatenate %51, %50 in 1 : vector<4x252xf32>, vector<4x4xf32> -> vector<4x256xf32>
    %53 = vector.extract_strided_slice %2 {offsets = [8, 0], sizes = [1, 256], strides = [1, 1]} : vector<9x256xf32> to vector<1x256xf32>
    %54 = vector.broadcast %53 : vector<1x256xf32> to vector<4x256xf32>
    %55 = arith.mulf %52, %54 : vector<4x256xf32>
    %56 = tpu.concatenate %10, %16, %22, %28, %31, %37, %43, %49, %55 in 0 : vector<4x256xf32>, vector<4x256xf32>, vector<4x256xf32>, vector<4x256xf32>, vector<4x256xf32>, vector<4x256xf32>, vector<4x256xf32>, vector<4x256xf32>, vector<4x256xf32> -> vector<36x256xf32>
    %cst_15 = arith.constant dense<0.000000e+00> : vector<8x256xf32>
    %57 = tpu.matmul %3, %56, %cst_15 {dimension_numbers = #tpu.dot_dimension_numbers<[1], [0], [0], [1], [0, 0, 1, 1], [], []>} : vector<8x36xf32>, vector<36x256xf32>, vector<8x256xf32> -> vector<8x256xf32>
    %58 = vector.broadcast %4 : vector<8x1xf32> to vector<8x256xf32>
    %59 = arith.addf %57, %58 : vector<8x256xf32>
    %c0_16 = arith.constant 0 : index
    %c0_17 = arith.constant 0 : index
    %60 = vector.load %arg4[%c0_16, %c0_17] : memref<8x72xf32, #tpu.memory_space<vmem>>, vector<8x72xf32>
    %c0_18 = arith.constant 0 : index
    %c0_19 = arith.constant 0 : index
    %61 = vector.load %arg5[%c0_18, %c0_19] : memref<8x1xf32, #tpu.memory_space<vmem>>, vector<8x1xf32>
    %cst_20 = arith.constant 0.000000e+00 : f32
    %62 = vector.broadcast %cst_20 : f32 to vector<8x64xf32>
    %63 = vector.extract_strided_slice %59 {offsets = [0, 0], sizes = [8, 192], strides = [1, 1]} : vector<8x256xf32> to vector<8x192xf32>
    %64 = tpu.concatenate %62, %63 in 1 : vector<8x64xf32>, vector<8x192xf32> -> vector<8x256xf32>
    %cst_21 = arith.constant 0.000000e+00 : f32
    %65 = vector.broadcast %cst_21 : f32 to vector<8x48xf32>
    %66 = vector.extract_strided_slice %59 {offsets = [0, 0], sizes = [8, 208], strides = [1, 1]} : vector<8x256xf32> to vector<8x208xf32>
    %67 = tpu.concatenate %65, %66 in 1 : vector<8x48xf32>, vector<8x208xf32> -> vector<8x256xf32>
    %cst_22 = arith.constant 0.000000e+00 : f32
    %68 = vector.broadcast %cst_22 : f32 to vector<8x32xf32>
    %69 = vector.extract_strided_slice %59 {offsets = [0, 0], sizes = [8, 224], strides = [1, 1]} : vector<8x256xf32> to vector<8x224xf32>
    %70 = tpu.concatenate %68, %69 in 1 : vector<8x32xf32>, vector<8x224xf32> -> vector<8x256xf32>
    %cst_23 = arith.constant 0.000000e+00 : f32
    %71 = vector.broadcast %cst_23 : f32 to vector<8x16xf32>
    %72 = vector.extract_strided_slice %59 {offsets = [0, 0], sizes = [8, 240], strides = [1, 1]} : vector<8x256xf32> to vector<8x240xf32>
    %73 = tpu.concatenate %71, %72 in 1 : vector<8x16xf32>, vector<8x240xf32> -> vector<8x256xf32>
    %cst_24 = arith.constant 0.000000e+00 : f32
    %74 = vector.broadcast %cst_24 : f32 to vector<8x16xf32>
    %75 = vector.extract_strided_slice %59 {offsets = [0, 16], sizes = [8, 240], strides = [1, 1]} : vector<8x256xf32> to vector<8x240xf32>
    %76 = tpu.concatenate %75, %74 in 1 : vector<8x240xf32>, vector<8x16xf32> -> vector<8x256xf32>
    %cst_25 = arith.constant 0.000000e+00 : f32
    %77 = vector.broadcast %cst_25 : f32 to vector<8x32xf32>
    %78 = vector.extract_strided_slice %59 {offsets = [0, 32], sizes = [8, 224], strides = [1, 1]} : vector<8x256xf32> to vector<8x224xf32>
    %79 = tpu.concatenate %78, %77 in 1 : vector<8x224xf32>, vector<8x32xf32> -> vector<8x256xf32>
    %cst_26 = arith.constant 0.000000e+00 : f32
    %80 = vector.broadcast %cst_26 : f32 to vector<8x48xf32>
    %81 = vector.extract_strided_slice %59 {offsets = [0, 48], sizes = [8, 208], strides = [1, 1]} : vector<8x256xf32> to vector<8x208xf32>
    %82 = tpu.concatenate %81, %80 in 1 : vector<8x208xf32>, vector<8x48xf32> -> vector<8x256xf32>
    %cst_27 = arith.constant 0.000000e+00 : f32
    %83 = vector.broadcast %cst_27 : f32 to vector<8x64xf32>
    %84 = vector.extract_strided_slice %59 {offsets = [0, 64], sizes = [8, 192], strides = [1, 1]} : vector<8x256xf32> to vector<8x192xf32>
    %85 = tpu.concatenate %84, %83 in 1 : vector<8x192xf32>, vector<8x64xf32> -> vector<8x256xf32>
    %86 = tpu.concatenate %64, %67, %70, %73, %59, %76, %79, %82, %85 in 0 : vector<8x256xf32>, vector<8x256xf32>, vector<8x256xf32>, vector<8x256xf32>, vector<8x256xf32>, vector<8x256xf32>, vector<8x256xf32>, vector<8x256xf32>, vector<8x256xf32> -> vector<72x256xf32>
    %cst_28 = arith.constant dense<0.000000e+00> : vector<8x256xf32>
    %87 = tpu.matmul %60, %86, %cst_28 {dimension_numbers = #tpu.dot_dimension_numbers<[1], [0], [0], [1], [0, 0, 1, 1], [], []>} : vector<8x72xf32>, vector<72x256xf32>, vector<8x256xf32> -> vector<8x256xf32>
    %88 = vector.broadcast %61 : vector<8x1xf32> to vector<8x256xf32>
    %89 = arith.addf %87, %88 : vector<8x256xf32>
    %c0_29 = arith.constant 0 : index
    %c0_30 = arith.constant 0 : index
    %90 = vector.load %arg6[%c0_29, %c0_30] : memref<8x36xf32, #tpu.memory_space<vmem>>, vector<8x36xf32>
    %c0_31 = arith.constant 0 : index
    %c0_32 = arith.constant 0 : index
    %91 = vector.load %arg7[%c0_31, %c0_32] : memref<8x1xf32, #tpu.memory_space<vmem>>, vector<8x1xf32>
    %cst_33 = arith.constant 0.000000e+00 : f32
    %92 = vector.broadcast %cst_33 : f32 to vector<4x64xf32>
    %93 = vector.extract_strided_slice %1 {offsets = [0, 0], sizes = [4, 192], strides = [1, 1]} : vector<4x256xf32> to vector<4x192xf32>
    %94 = tpu.concatenate %92, %93 in 1 : vector<4x64xf32>, vector<4x192xf32> -> vector<4x256xf32>
    %cst_34 = arith.constant 0.000000e+00 : f32
    %95 = vector.broadcast %cst_34 : f32 to vector<4x48xf32>
    %96 = vector.extract_strided_slice %1 {offsets = [0, 0], sizes = [4, 208], strides = [1, 1]} : vector<4x256xf32> to vector<4x208xf32>
    %97 = tpu.concatenate %95, %96 in 1 : vector<4x48xf32>, vector<4x208xf32> -> vector<4x256xf32>
    %cst_35 = arith.constant 0.000000e+00 : f32
    %98 = vector.broadcast %cst_35 : f32 to vector<4x32xf32>
    %99 = vector.extract_strided_slice %1 {offsets = [0, 0], sizes = [4, 224], strides = [1, 1]} : vector<4x256xf32> to vector<4x224xf32>
    %100 = tpu.concatenate %98, %99 in 1 : vector<4x32xf32>, vector<4x224xf32> -> vector<4x256xf32>
    %cst_36 = arith.constant 0.000000e+00 : f32
    %101 = vector.broadcast %cst_36 : f32 to vector<4x16xf32>
    %102 = vector.extract_strided_slice %1 {offsets = [0, 0], sizes = [4, 240], strides = [1, 1]} : vector<4x256xf32> to vector<4x240xf32>
    %103 = tpu.concatenate %101, %102 in 1 : vector<4x16xf32>, vector<4x240xf32> -> vector<4x256xf32>
    %cst_37 = arith.constant 0.000000e+00 : f32
    %104 = vector.broadcast %cst_37 : f32 to vector<4x16xf32>
    %105 = vector.extract_strided_slice %1 {offsets = [0, 16], sizes = [4, 240], strides = [1, 1]} : vector<4x256xf32> to vector<4x240xf32>
    %106 = tpu.concatenate %105, %104 in 1 : vector<4x240xf32>, vector<4x16xf32> -> vector<4x256xf32>
    %cst_38 = arith.constant 0.000000e+00 : f32
    %107 = vector.broadcast %cst_38 : f32 to vector<4x32xf32>
    %108 = vector.extract_strided_slice %1 {offsets = [0, 32], sizes = [4, 224], strides = [1, 1]} : vector<4x256xf32> to vector<4x224xf32>
    %109 = tpu.concatenate %108, %107 in 1 : vector<4x224xf32>, vector<4x32xf32> -> vector<4x256xf32>
    %cst_39 = arith.constant 0.000000e+00 : f32
    %110 = vector.broadcast %cst_39 : f32 to vector<4x48xf32>
    %111 = vector.extract_strided_slice %1 {offsets = [0, 48], sizes = [4, 208], strides = [1, 1]} : vector<4x256xf32> to vector<4x208xf32>
    %112 = tpu.concatenate %111, %110 in 1 : vector<4x208xf32>, vector<4x48xf32> -> vector<4x256xf32>
    %cst_40 = arith.constant 0.000000e+00 : f32
    %113 = vector.broadcast %cst_40 : f32 to vector<4x64xf32>
    %114 = vector.extract_strided_slice %1 {offsets = [0, 64], sizes = [4, 192], strides = [1, 1]} : vector<4x256xf32> to vector<4x192xf32>
    %115 = tpu.concatenate %114, %113 in 1 : vector<4x192xf32>, vector<4x64xf32> -> vector<4x256xf32>
    %116 = tpu.concatenate %94, %97, %100, %103, %1, %106, %109, %112, %115 in 0 : vector<4x256xf32>, vector<4x256xf32>, vector<4x256xf32>, vector<4x256xf32>, vector<4x256xf32>, vector<4x256xf32>, vector<4x256xf32>, vector<4x256xf32>, vector<4x256xf32> -> vector<36x256xf32>
    %cst_41 = arith.constant dense<0.000000e+00> : vector<8x256xf32>
    %117 = tpu.matmul %90, %116, %cst_41 {dimension_numbers = #tpu.dot_dimension_numbers<[1], [0], [0], [1], [0, 0, 1, 1], [], []>} : vector<8x36xf32>, vector<36x256xf32>, vector<8x256xf32> -> vector<8x256xf32>
    %118 = vector.broadcast %91 : vector<8x1xf32> to vector<8x256xf32>
    %119 = arith.addf %117, %118 : vector<8x256xf32>
    %c0_42 = arith.constant 0 : index
    %c0_43 = arith.constant 0 : index
    %120 = vector.load %arg8[%c0_42, %c0_43] : memref<8x72xf32, #tpu.memory_space<vmem>>, vector<8x72xf32>
    %c0_44 = arith.constant 0 : index
    %c0_45 = arith.constant 0 : index
    %121 = vector.load %arg9[%c0_44, %c0_45] : memref<8x1xf32, #tpu.memory_space<vmem>>, vector<8x1xf32>
    %cst_46 = arith.constant 0.000000e+00 : f32
    %122 = vector.broadcast %cst_46 : f32 to vector<8x4xf32>
    %123 = vector.extract_strided_slice %119 {offsets = [0, 0], sizes = [8, 252], strides = [1, 1]} : vector<8x256xf32> to vector<8x252xf32>
    %124 = tpu.concatenate %122, %123 in 1 : vector<8x4xf32>, vector<8x252xf32> -> vector<8x256xf32>
    %125 = vector.extract_strided_slice %2 {offsets = [0, 0], sizes = [1, 256], strides = [1, 1]} : vector<9x256xf32> to vector<1x256xf32>
    %126 = vector.broadcast %125 : vector<1x256xf32> to vector<8x256xf32>
    %127 = arith.mulf %124, %126 : vector<8x256xf32>
    %cst_47 = arith.constant 0.000000e+00 : f32
    %128 = vector.broadcast %cst_47 : f32 to vector<8x3xf32>
    %129 = vector.extract_strided_slice %119 {offsets = [0, 0], sizes = [8, 253], strides = [1, 1]} : vector<8x256xf32> to vector<8x253xf32>
    %130 = tpu.concatenate %128, %129 in 1 : vector<8x3xf32>, vector<8x253xf32> -> vector<8x256xf32>
    %131 = vector.extract_strided_slice %2 {offsets = [1, 0], sizes = [1, 256], strides = [1, 1]} : vector<9x256xf32> to vector<1x256xf32>
    %132 = vector.broadcast %131 : vector<1x256xf32> to vector<8x256xf32>
    %133 = arith.mulf %130, %132 : vector<8x256xf32>
    %cst_48 = arith.constant 0.000000e+00 : f32
    %134 = vector.broadcast %cst_48 : f32 to vector<8x2xf32>
    %135 = vector.extract_strided_slice %119 {offsets = [0, 0], sizes = [8, 254], strides = [1, 1]} : vector<8x256xf32> to vector<8x254xf32>
    %136 = tpu.concatenate %134, %135 in 1 : vector<8x2xf32>, vector<8x254xf32> -> vector<8x256xf32>
    %137 = vector.extract_strided_slice %2 {offsets = [2, 0], sizes = [1, 256], strides = [1, 1]} : vector<9x256xf32> to vector<1x256xf32>
    %138 = vector.broadcast %137 : vector<1x256xf32> to vector<8x256xf32>
    %139 = arith.mulf %136, %138 : vector<8x256xf32>
    %cst_49 = arith.constant 0.000000e+00 : f32
    %140 = vector.broadcast %cst_49 : f32 to vector<8x1xf32>
    %141 = vector.extract_strided_slice %119 {offsets = [0, 0], sizes = [8, 255], strides = [1, 1]} : vector<8x256xf32> to vector<8x255xf32>
    %142 = tpu.concatenate %140, %141 in 1 : vector<8x1xf32>, vector<8x255xf32> -> vector<8x256xf32>
    %143 = vector.extract_strided_slice %2 {offsets = [3, 0], sizes = [1, 256], strides = [1, 1]} : vector<9x256xf32> to vector<1x256xf32>
    %144 = vector.broadcast %143 : vector<1x256xf32> to vector<8x256xf32>
    %145 = arith.mulf %142, %144 : vector<8x256xf32>
    %146 = vector.extract_strided_slice %2 {offsets = [4, 0], sizes = [1, 256], strides = [1, 1]} : vector<9x256xf32> to vector<1x256xf32>
    %147 = vector.broadcast %146 : vector<1x256xf32> to vector<8x256xf32>
    %148 = arith.mulf %119, %147 : vector<8x256xf32>
    %cst_50 = arith.constant 0.000000e+00 : f32
    %149 = vector.broadcast %cst_50 : f32 to vector<8x1xf32>
    %150 = vector.extract_strided_slice %119 {offsets = [0, 1], sizes = [8, 255], strides = [1, 1]} : vector<8x256xf32> to vector<8x255xf32>
    %151 = tpu.concatenate %150, %149 in 1 : vector<8x255xf32>, vector<8x1xf32> -> vector<8x256xf32>
    %152 = vector.extract_strided_slice %2 {offsets = [5, 0], sizes = [1, 256], strides = [1, 1]} : vector<9x256xf32> to vector<1x256xf32>
    %153 = vector.broadcast %152 : vector<1x256xf32> to vector<8x256xf32>
    %154 = arith.mulf %151, %153 : vector<8x256xf32>
    %cst_51 = arith.constant 0.000000e+00 : f32
    %155 = vector.broadcast %cst_51 : f32 to vector<8x2xf32>
    %156 = vector.extract_strided_slice %119 {offsets = [0, 2], sizes = [8, 254], strides = [1, 1]} : vector<8x256xf32> to vector<8x254xf32>
    %157 = tpu.concatenate %156, %155 in 1 : vector<8x254xf32>, vector<8x2xf32> -> vector<8x256xf32>
    %158 = vector.extract_strided_slice %2 {offsets = [6, 0], sizes = [1, 256], strides = [1, 1]} : vector<9x256xf32> to vector<1x256xf32>
    %159 = vector.broadcast %158 : vector<1x256xf32> to vector<8x256xf32>
    %160 = arith.mulf %157, %159 : vector<8x256xf32>
    %cst_52 = arith.constant 0.000000e+00 : f32
    %161 = vector.broadcast %cst_52 : f32 to vector<8x3xf32>
    %162 = vector.extract_strided_slice %119 {offsets = [0, 3], sizes = [8, 253], strides = [1, 1]} : vector<8x256xf32> to vector<8x253xf32>
    %163 = tpu.concatenate %162, %161 in 1 : vector<8x253xf32>, vector<8x3xf32> -> vector<8x256xf32>
    %164 = vector.extract_strided_slice %2 {offsets = [7, 0], sizes = [1, 256], strides = [1, 1]} : vector<9x256xf32> to vector<1x256xf32>
    %165 = vector.broadcast %164 : vector<1x256xf32> to vector<8x256xf32>
    %166 = arith.mulf %163, %165 : vector<8x256xf32>
    %cst_53 = arith.constant 0.000000e+00 : f32
    %167 = vector.broadcast %cst_53 : f32 to vector<8x4xf32>
    %168 = vector.extract_strided_slice %119 {offsets = [0, 4], sizes = [8, 252], strides = [1, 1]} : vector<8x256xf32> to vector<8x252xf32>
    %169 = tpu.concatenate %168, %167 in 1 : vector<8x252xf32>, vector<8x4xf32> -> vector<8x256xf32>
    %170 = vector.extract_strided_slice %2 {offsets = [8, 0], sizes = [1, 256], strides = [1, 1]} : vector<9x256xf32> to vector<1x256xf32>
    %171 = vector.broadcast %170 : vector<1x256xf32> to vector<8x256xf32>
    %172 = arith.mulf %169, %171 : vector<8x256xf32>
    %173 = tpu.concatenate %127, %133, %139, %145, %148, %154, %160, %166, %172 in 0 : vector<8x256xf32>, vector<8x256xf32>, vector<8x256xf32>, vector<8x256xf32>, vector<8x256xf32>, vector<8x256xf32>, vector<8x256xf32>, vector<8x256xf32>, vector<8x256xf32> -> vector<72x256xf32>
    %cst_54 = arith.constant dense<0.000000e+00> : vector<8x256xf32>
    %174 = tpu.matmul %120, %173, %cst_54 {dimension_numbers = #tpu.dot_dimension_numbers<[1], [0], [0], [1], [0, 0, 1, 1], [], []>} : vector<8x72xf32>, vector<72x256xf32>, vector<8x256xf32> -> vector<8x256xf32>
    %175 = vector.broadcast %121 : vector<8x1xf32> to vector<8x256xf32>
    %176 = arith.addf %174, %175 : vector<8x256xf32>
    %177 = arith.addf %89, %176 : vector<8x256xf32>
    %c0_55 = arith.constant 0 : index
    %c0_56 = arith.constant 0 : index
    %c0_57 = arith.constant 0 : index
    %178 = vector.load %arg11[%c0_55, %c0_56, %c0_57] : memref<1x8x256xf32, #tpu.memory_space<vmem>>, vector<1x8x256xf32>
    %179 = vector.shape_cast %178 : vector<1x8x256xf32> to vector<8x256xf32>
    %180 = vector.shape_cast %177 : vector<8x256xf32> to vector<1x8x256xf32>
    tpu.vector_store %arg11[%c0_55, %c0_56, %c0_57], %180 {strides = array<i32>} : memref<1x8x256xf32, #tpu.memory_space<vmem>>, vector<1x8x256xf32>,
    return
  }
  func.func @transform_0(%arg0: i32) -> (i32, i32, i32) {
    %c0_i32 = arith.constant 0 : i32
    %c0_i32_0 = arith.constant 0 : i32
    %c0_i32_1 = arith.constant 0 : i32
    return %arg0, %c0_i32, %c0_i32_0 : i32, i32, i32
  }
  func.func @transform_1(%arg0: i32) -> (i32, i32) {
    %c0_i32 = arith.constant 0 : i32
    %c0_i32_0 = arith.constant 0 : i32
    %c0_i32_1 = arith.constant 0 : i32
    return %c0_i32, %c0_i32_0 : i32, i32
  }
  func.func @transform_2(%arg0: i32) -> (i32, i32) {
    %c0_i32 = arith.constant 0 : i32
    %c0_i32_0 = arith.constant 0 : i32
    %c0_i32_1 = arith.constant 0 : i32
    return %c0_i32, %c0_i32_0 : i32, i32
  }
  func.func @transform_3(%arg0: i32) -> (i32, i32) {
    %c0_i32 = arith.constant 0 : i32
    %c0_i32_0 = arith.constant 0 : i32
    %c0_i32_1 = arith.constant 0 : i32
    return %c0_i32, %c0_i32_0 : i32, i32
  }
  func.func @transform_4(%arg0: i32) -> (i32, i32) {
    %c0_i32 = arith.constant 0 : i32
    %c0_i32_0 = arith.constant 0 : i32
    %c0_i32_1 = arith.constant 0 : i32
    return %c0_i32, %c0_i32_0 : i32, i32
  }
  func.func @transform_5(%arg0: i32) -> (i32, i32) {
    %c0_i32 = arith.constant 0 : i32
    %c0_i32_0 = arith.constant 0 : i32
    %c0_i32_1 = arith.constant 0 : i32
    return %c0_i32, %c0_i32_0 : i32, i32
  }
  func.func @transform_6(%arg0: i32) -> (i32, i32) {
    %c0_i32 = arith.constant 0 : i32
    %c0_i32_0 = arith.constant 0 : i32
    %c0_i32_1 = arith.constant 0 : i32
    return %c0_i32, %c0_i32_0 : i32, i32
  }
  func.func @transform_7(%arg0: i32) -> (i32, i32) {
    %c0_i32 = arith.constant 0 : i32
    %c0_i32_0 = arith.constant 0 : i32
    %c0_i32_1 = arith.constant 0 : i32
    return %c0_i32, %c0_i32_0 : i32, i32
  }
  func.func @transform_8(%arg0: i32) -> (i32, i32) {
    %c0_i32 = arith.constant 0 : i32
    %c0_i32_0 = arith.constant 0 : i32
    %c0_i32_1 = arith.constant 0 : i32
    return %c0_i32, %c0_i32_0 : i32, i32
  }
  func.func @transform_9(%arg0: i32) -> (i32, i32) {
    %c0_i32 = arith.constant 0 : i32
    %c0_i32_0 = arith.constant 0 : i32
    %c0_i32_1 = arith.constant 0 : i32
    return %c0_i32, %c0_i32_0 : i32, i32
  }
  func.func @transform_10(%arg0: i32) -> (i32, i32, i32) {
    %c0_i32 = arith.constant 0 : i32
    %c0_i32_0 = arith.constant 0 : i32
    %c0_i32_1 = arith.constant 0 : i32
    return %arg0, %c0_i32, %c0_i32_0 : i32, i32, i32
  }
}

</mosaic_0001>

<llo_original>
// kernel: gcn_forward.1
$region0: #{gcn_forward.1}
  #allocation0 [shape = 'u32[]', space=smem, size = 0x4, offset = 0x4, fixed_abs, tag = 'smem constant byte address 0x4 - core index']
  #allocation1 [shape = 'u32[144,128]{1,0:T(1,128)}', space=vmem, size = 0x12000, scoped, tag = 'internal scratch']
  %s0 = inlined_call_operand.vmem [shape: f32[2,4,256], index: 0, kind: input, shape index: {}]
  %s1 = inlined_call_operand.vmem [shape: f32[8,36], index: 1, kind: input, shape index: {}]
  %s2 = inlined_call_operand.vmem [shape: f32[8,1], index: 2, kind: input, shape index: {}]
  %s3 = inlined_call_operand.vmem [shape: f32[8,72], index: 3, kind: input, shape index: {}]
  %s4 = inlined_call_operand.vmem [shape: f32[8,1], index: 4, kind: input, shape index: {}]
  %s5 = inlined_call_operand.vmem [shape: f32[8,36], index: 5, kind: input, shape index: {}]
  %s6 = inlined_call_operand.vmem [shape: f32[8,1], index: 6, kind: input, shape index: {}]
  %s7 = inlined_call_operand.vmem [shape: f32[8,72], index: 7, kind: input, shape index: {}]
  %s8 = inlined_call_operand.vmem [shape: f32[8,1], index: 8, kind: input, shape index: {}]
  %s9 = inlined_call_operand.vmem [shape: f32[9,256], index: 9, kind: input, shape index: {}]
  %s10 = inlined_call_operand.vmem [shape: f32[2,8,256], index: 10, kind: output, shape index: {}]
  %s11 = sld [smem:[#allocation0]]
  $region73: #{gcn_forward.1} parent=0
    _
  %s13 = ssub.s32 1, %s11
  %s14 = scalar_select 0, %s13, %s11
  loop: start=0, step=1, limit=4
  $region2: #{gcn_forward.1} parent=0 // loop_pre_header
    _
  $region3: #{gcn_forward.1} parent=0 // loop_header
    %s16 = sphi 0, %s20
    %p17 = scmp.ge.s32.totalorder %s16, 4
    %s26 = sphi 0, %s28
    %s29 = sphi 0, %s26
    %s30 = sphi 0, %s29
    %s46 = sphi 0, %s30
    %s50 = sphi 0, %s50
    %s52 = sphi 0, %s50
    %s53 = sphi 0, %s52
    %s67 = sphi 0, %s53
    %s71 = sphi 0, %s71
    %s73 = sphi 0, %s71
    %s74 = sphi 0, %s73
    %s88 = sphi 0, %s74
    %s92 = sphi 0, %s92
    %s94 = sphi 0, %s92
    %s95 = sphi 0, %s94
    %s109 = sphi 0, %s95
    %s113 = sphi 0, %s113
    %s115 = sphi 0, %s113
    %s116 = sphi 0, %s115
    %s130 = sphi 0, %s116
    %s134 = sphi 0, %s134
    %s136 = sphi 0, %s134
    %s137 = sphi 0, %s136
    %s151 = sphi 0, %s137
    %s155 = sphi 0, %s155
    %s157 = sphi 0, %s155
    %s158 = sphi 0, %s157
    %s172 = sphi 0, %s158
    %s176 = sphi 0, %s176
    %s178 = sphi 0, %s176
    %s179 = sphi 0, %s178
    %s193 = sphi 0, %s179
    %s197 = sphi 0, %s197
    %s199 = sphi 0, %s197
    %s200 = sphi 0, %s199
    %s214 = sphi 0, %s200
    %s218 = sphi 0, %s218
    %s220 = sphi 0, %s218
    %s221 = sphi 0, %s220
    %s235 = sphi 0, %s221
    %s241 = sphi 0, %s243
    %s244 = sphi 0, %s241
    %s245 = sphi 0, %s244
    %s261 = sphi 0, %s245
  $region4: #{gcn_forward.1} parent=0 // loop_header_branch
    %19 = sbr.rel (%p17) target = $region8
  $region5: #{gcn_forward.1} parent=0 // loop_body
    %s21 = ssub.s32 %s16, 1
    %s22 = ssub.s32 %s16, 2
    %s23 = sadd.s32 %s16, 1
    %s24 = ssub.s32 %s16, %s23
    %p25 = scmp.eq.s32.totalorder %s24, 0
    %s27 = sadd.s32 %s26, 1
    %s28 = scalar_select %p25, %s26, %s27
    %p31 = pneg %p25
    %p32 = scmp.eq.s32.totalorder %s16, 1
    %p33 = por %p31, %p32
    %p34 = scmp.ne.s32.totalorder %s26, %s29
    %p35 = scmp.eq.s32.totalorder %s16, 0
    %p36 = por %p34, %p35
    %p37 = scmp.ne.s32.totalorder %s26, %s29
    %p38 = scmp.eq.s32.totalorder %s21, 1
    %p39 = por %p37, %p38
    %p40 = scmp.ne.s32.totalorder %s29, %s30
    %p41 = scmp.eq.s32.totalorder %s21, 0
    %p42 = por %p40, %p41
    %p43 = scmp.ne.s32.totalorder %s29, %s30
    %p44 = scmp.eq.s32.totalorder %s22, 1
    %p45 = por %p43, %p44
    %p47 = scmp.ne.s32.totalorder %s30, %s46
    %p48 = scmp.eq.s32.totalorder %s22, 0
    %p49 = por %p47, %p48
    %s51 = sadd.s32 %s50, 1
    %p54 = scmp.eq.s32.totalorder %s16, 1
    %p55 = scmp.ne.s32.totalorder %s50, %s52
    %p56 = scmp.eq.s32.totalorder %s16, 0
    %p57 = por %p55, %p56
    %p58 = scmp.ne.s32.totalorder %s50, %s52
    %p59 = scmp.eq.s32.totalorder %s21, 1
    %p60 = por %p58, %p59
    %p61 = scmp.ne.s32.totalorder %s52, %s53
    %p62 = scmp.eq.s32.totalorder %s21, 0
    %p63 = por %p61, %p62
    %p64 = scmp.ne.s32.totalorder %s52, %s53
    %p65 = scmp.eq.s32.totalorder %s22, 1
    %p66 = por %p64, %p65
    %p68 = scmp.ne.s32.totalorder %s53, %s67
    %p69 = scmp.eq.s32.totalorder %s22, 0
    %p70 = por %p68, %p69
    %s72 = sadd.s32 %s71, 1
    %p75 = scmp.eq.s32.totalorder %s16, 1
    %p76 = scmp.ne.s32.totalorder %s71, %s73
    %p77 = scmp.eq.s32.totalorder %s16, 0
    %p78 = por %p76, %p77
    %p79 = scmp.ne.s32.totalorder %s71, %s73
    %p80 = scmp.eq.s32.totalorder %s21, 1
    %p81 = por %p79, %p80
    %p82 = scmp.ne.s32.totalorder %s73, %s74
    %p83 = scmp.eq.s32.totalorder %s21, 0
    %p84 = por %p82, %p83
    %p85 = scmp.ne.s32.totalorder %s73, %s74
    %p86 = scmp.eq.s32.totalorder %s22, 1
    %p87 = por %p85, %p86
    %p89 = scmp.ne.s32.totalorder %s74, %s88
    %p90 = scmp.eq.s32.totalorder %s22, 0
    %p91 = por %p89, %p90
    %s93 = sadd.s32 %s92, 1
    %p96 = scmp.eq.s32.totalorder %s16, 1
    %p97 = scmp.ne.s32.totalorder %s92, %s94
    %p98 = scmp.eq.s32.totalorder %s16, 0
    %p99 = por %p97, %p98
    %p100 = scmp.ne.s32.totalorder %s92, %s94
    %p101 = scmp.eq.s32.totalorder %s21, 1
    %p102 = por %p100, %p101
    %p103 = scmp.ne.s32.totalorder %s94, %s95
    %p104 = scmp.eq.s32.totalorder %s21, 0
    %p105 = por %p103, %p104
    %p106 = scmp.ne.s32.totalorder %s94, %s95
    %p107 = scmp.eq.s32.totalorder %s22, 1
    %p108 = por %p106, %p107
    %p110 = scmp.ne.s32.totalorder %s95, %s109
    %p111 = scmp.eq.s32.totalorder %s22, 0
    %p112 = por %p110, %p111
    %s114 = sadd.s32 %s113, 1
    %p117 = scmp.eq.s32.totalorder %s16, 1
    %p118 = scmp.ne.s32.totalorder %s113, %s115
    %p119 = scmp.eq.s32.totalorder %s16, 0
    %p120 = por %p118, %p119
    %p121 = scmp.ne.s32.totalorder %s113, %s115
    %p122 = scmp.eq.s32.totalorder %s21, 1
    %p123 = por %p121, %p122
    %p124 = scmp.ne.s32.totalorder %s115, %s116
    %p125 = scmp.eq.s32.totalorder %s21, 0
    %p126 = por %p124, %p125
    %p127 = scmp.ne.s32.totalorder %s115, %s116
    %p128 = scmp.eq.s32.totalorder %s22, 1
    %p129 = por %p127, %p128
    %p131 = scmp.ne.s32.totalorder %s116, %s130
    %p132 = scmp.eq.s32.totalorder %s22, 0
    %p133 = por %p131, %p132
    %s135 = sadd.s32 %s134, 1
    %p138 = scmp.eq.s32.totalorder %s16, 1
    %p139 = scmp.ne.s32.totalorder %s134, %s136
    %p140 = scmp.eq.s32.totalorder %s16, 0
    %p141 = por %p139, %p140
    %p142 = scmp.ne.s32.totalorder %s134, %s136
    %p143 = scmp.eq.s32.totalorder %s21, 1
    %p144 = por %p142, %p143
    %p145 = scmp.ne.s32.totalorder %s136, %s137
    %p146 = scmp.eq.s32.totalorder %s21, 0
    %p147 = por %p145, %p146
    %p148 = scmp.ne.s32.totalorder %s136, %s137
    %p149 = scmp.eq.s32.totalorder %s22, 1
    %p150 = por %p148, %p149
    %p152 = scmp.ne.s32.totalorder %s137, %s151
    %p153 = scmp.eq.s32.totalorder %s22, 0
    %p154 = por %p152, %p153
    %s156 = sadd.s32 %s155, 1
    %p159 = scmp.eq.s32.totalorder %s16, 1
    %p160 = scmp.ne.s32.totalorder %s155, %s157
    %p161 = scmp.eq.s32.totalorder %s16, 0
    %p162 = por %p160, %p161
    %p163 = scmp.ne.s32.totalorder %s155, %s157
    %p164 = scmp.eq.s32.totalorder %s21, 1
    %p165 = por %p163, %p164
    %p166 = scmp.ne.s32.totalorder %s157, %s158
    %p167 = scmp.eq.s32.totalorder %s21, 0
    %p168 = por %p166, %p167
    %p169 = scmp.ne.s32.totalorder %s157, %s158
    %p170 = scmp.eq.s32.totalorder %s22, 1
    %p171 = por %p169, %p170
    %p173 = scmp.ne.s32.totalorder %s158, %s172
    %p174 = scmp.eq.s32.totalorder %s22, 0
    %p175 = por %p173, %p174
    %s177 = sadd.s32 %s176, 1
    %p180 = scmp.eq.s32.totalorder %s16, 1
    %p181 = scmp.ne.s32.totalorder %s176, %s178
    %p182 = scmp.eq.s32.totalorder %s16, 0
    %p183 = por %p181, %p182
    %p184 = scmp.ne.s32.totalorder %s176, %s178
    %p185 = scmp.eq.s32.totalorder %s21, 1
    %p186 = por %p184, %p185
    %p187 = scmp.ne.s32.totalorder %s178, %s179
    %p188 = scmp.eq.s32.totalorder %s21, 0
    %p189 = por %p187, %p188
    %p190 = scmp.ne.s32.totalorder %s178, %s179
    %p191 = scmp.eq.s32.totalorder %s22, 1
    %p192 = por %p190, %p191
    %p194 = scmp.ne.s32.totalorder %s179, %s193
    %p195 = scmp.eq.s32.totalorder %s22, 0
    %p196 = por %p194, %p195
    %s198 = sadd.s32 %s197, 1
    %p201 = scmp.eq.s32.totalorder %s16, 1
    %p202 = scmp.ne.s32.totalorder %s197, %s199
    %p203 = scmp.eq.s32.totalorder %s16, 0
    %p204 = por %p202, %p203
    %p205 = scmp.ne.s32.totalorder %s197, %s199
    %p206 = scmp.eq.s32.totalorder %s21, 1
    %p207 = por %p205, %p206
    %p208 = scmp.ne.s32.totalorder %s199, %s200
    %p209 = scmp.eq.s32.totalorder %s21, 0
    %p210 = por %p208, %p209
    %p211 = scmp.ne.s32.totalorder %s199, %s200
    %p212 = scmp.eq.s32.totalorder %s22, 1
    %p213 = por %p211, %p212
    %p215 = scmp.ne.s32.totalorder %s200, %s214
    %p216 = scmp.eq.s32.totalorder %s22, 0
    %p217 = por %p215, %p216
    %s219 = sadd.s32 %s218, 1
    %p222 = scmp.eq.s32.totalorder %s16, 1
    %p223 = scmp.ne.s32.totalorder %s218, %s220
    %p224 = scmp.eq.s32.totalorder %s16, 0
    %p225 = por %p223, %p224
    %p226 = scmp.ne.s32.totalorder %s218, %s220
    %p227 = scmp.eq.s32.totalorder %s21, 1
    %p228 = por %p226, %p227
    %p229 = scmp.ne.s32.totalorder %s220, %s221
    %p230 = scmp.eq.s32.totalorder %s21, 0
    %p231 = por %p229, %p230
    %p232 = scmp.ne.s32.totalorder %s220, %s221
    %p233 = scmp.eq.s32.totalorder %s22, 1
    %p234 = por %p232, %p233
    %p236 = scmp.ne.s32.totalorder %s221, %s235
    %p237 = scmp.eq.s32.totalorder %s22, 0
    %p238 = por %p236, %p237
    %s239 = ssub.s32 %s16, %s23
    %p240 = scmp.eq.s32.totalorder %s239, 0
    %s242 = sadd.s32 %s241, 1
    %s243 = scalar_select %p240, %s241, %s242
    %p246 = pneg %p240
    %p247 = scmp.eq.s32.totalorder %s16, 1
    %p248 = por %p246, %p247
    %p249 = scmp.ne.s32.totalorder %s241, %s244
    %p250 = scmp.eq.s32.totalorder %s16, 0
    %p251 = por %p249, %p250
    %p252 = scmp.ne.s32.totalorder %s241, %s244
    %p253 = scmp.eq.s32.totalorder %s21, 1
    %p254 = por %p252, %p253
    %p255 = scmp.ne.s32.totalorder %s244, %s245
    %p256 = scmp.eq.s32.totalorder %s21, 0
    %p257 = por %p255, %p256
    %p258 = scmp.ne.s32.totalorder %s244, %s245
    %p259 = scmp.eq.s32.totalorder %s22, 1
    %p260 = por %p258, %p259
    %p262 = scmp.ne.s32.totalorder %s245, %s261
    %p263 = scmp.eq.s32.totalorder %s22, 0
    %p264 = por %p262, %p263
    %p265 = scmp.le.s32.totalorder 1, %s16
    %p266 = scmp.lt.s32.totalorder %s16, 3
    %p267 = pnand %p265, %p266
    %p268 = pneg %p267
    // Predicated region
    $region9: #{gcn_forward.1} parent=5 // pred_check
      _
    $region10: #{gcn_forward.1} parent=5 // pred_check_branch
      %270 = sbr.rel (%p267) target = $region12
    $region11: #{gcn_forward.1} parent=5 // pred_region
      %s271 = ssub.s32 %s16, 1
      // Predicated region
      $region13: #{gcn_forward.1} parent=11 // pred_check
        %p272 = pneg %p63
      $region14: #{gcn_forward.1} parent=11 // pred_check_branch
        %274 = sbr.rel (%p272) target = $region16
      $region15: #{gcn_forward.1} parent=11 // pred_region
        _
      $region16: #{gcn_forward.1} parent=11 // pred_fallthru
        _
      // Predicated region
      $region17: #{gcn_forward.1} parent=11 // pred_check
        %p275 = pneg %p84
      $region18: #{gcn_forward.1} parent=11 // pred_check_branch
        %277 = sbr.rel (%p275) target = $region20
      $region19: #{gcn_forward.1} parent=11 // pred_region
        _
      $region20: #{gcn_forward.1} parent=11 // pred_fallthru
        _
      // Predicated region
      $region21: #{gcn_forward.1} parent=11 // pred_check
        %p278 = pneg %p105
      $region22: #{gcn_forward.1} parent=11 // pred_check_branch
        %280 = sbr.rel (%p278) target = $region24
      $region23: #{gcn_forward.1} parent=11 // pred_region
        _
      $region24: #{gcn_forward.1} parent=11 // pred_fallthru
        _
      // Predicated region
      $region25: #{gcn_forward.1} parent=11 // pred_check
        %p281 = pneg %p126
      $region26: #{gcn_forward.1} parent=11 // pred_check_branch
        %283 = sbr.rel (%p281) target = $region28
      $region27: #{gcn_forward.1} parent=11 // pred_region
        _
      $region28: #{gcn_forward.1} parent=11 // pred_fallthru
        _
      // Predicated region
      $region29: #{gcn_forward.1} parent=11 // pred_check
        %p284 = pneg %p147
      $region30: #{gcn_forward.1} parent=11 // pred_check_branch
        %286 = sbr.rel (%p284) target = $region32
      $region31: #{gcn_forward.1} parent=11 // pred_region
        _
      $region32: #{gcn_forward.1} parent=11 // pred_fallthru
        _
      // Predicated region
      $region33: #{gcn_forward.1} parent=11 // pred_check
        %p287 = pneg %p168
      $region34: #{gcn_forward.1} parent=11 // pred_check_branch
        %289 = sbr.rel (%p287) target = $region36
      $region35: #{gcn_forward.1} parent=11 // pred_region
        _
      $region36: #{gcn_forward.1} parent=11 // pred_fallthru
        _
      // Predicated region
      $region37: #{gcn_forward.1} parent=11 // pred_check
        %p290 = pneg %p189
      $region38: #{gcn_forward.1} parent=11 // pred_check_branch
        %292 = sbr.rel (%p290) target = $region40
      $region39: #{gcn_forward.1} parent=11 // pred_region
        _
      $region40: #{gcn_forward.1} parent=11 // pred_fallthru
        _
      // Predicated region
      $region41: #{gcn_forward.1} parent=11 // pred_check
        %p293 = pneg %p210
      $region42: #{gcn_forward.1} parent=11 // pred_check_branch
        %295 = sbr.rel (%p293) target = $region44
      $region43: #{gcn_forward.1} parent=11 // pred_region
        _
      $region44: #{gcn_forward.1} parent=11 // pred_fallthru
        _
      // Predicated region
      $region45: #{gcn_forward.1} parent=11 // pred_check
        %p296 = pneg %p231
      $region46: #{gcn_forward.1} parent=11 // pred_check_branch
        %298 = sbr.rel (%p296) target = $region48
      $region47: #{gcn_forward.1} parent=11 // pred_region
        _
      $region48: #{gcn_forward.1} parent=11 // pred_fallthru
        _
    $region12: #{gcn_forward.1} parent=5 // pred_fallthru
      _
    %p299 = scmp.lt.s32.totalorder %s16, 2
    // Predicated region
    $region49: #{gcn_forward.1} parent=5 // pred_check
      %p300 = pneg %p299
    $region50: #{gcn_forward.1} parent=5 // pred_check_branch
      %302 = sbr.rel (%p300) target = $region52
    $region51: #{gcn_forward.1} parent=5 // pred_region
      // Predicated region
      $region53: #{gcn_forward.1} parent=51 // pred_check
        %p303 = pneg %p36
      $region54: #{gcn_forward.1} parent=51 // pred_check_branch
        %305 = sbr.rel (%p303) target = $region56
      $region55: #{gcn_forward.1} parent=51 // pred_region
        %p306 = scmp.lt.s32.totalorder %s16, 1
        %s307 = scalar_select %p306, %s16, 1
        %s308 = smul.addr %s307, 2
        %s309 = smul.addr %s308, 4
        %s310 = scalar_lea.vmem %s0, %s309
      $region56: #{gcn_forward.1} parent=51 // pred_fallthru
        _
    $region52: #{gcn_forward.1} parent=5 // pred_fallthru
      _
    %p311 = scmp.le.s32.totalorder 1, %s16
    %p312 = scmp.lt.s32.totalorder %s16, 3
    %p313 = pnand %p311, %p312
    %p314 = pneg %p313
    // Predicated region
    $region57: #{gcn_forward.1} parent=5 // pred_check
      _
    $region58: #{gcn_forward.1} parent=5 // pred_check_branch
      %316 = sbr.rel (%p313) target = $region60
    $region59: #{gcn_forward.1} parent=5 // pred_region
      %s317 = ssub.s32 %s16, 1
      %p318 = scmp.lt.s32.totalorder %s21, 1
      %s319 = scalar_select %p318, %s21, 1
      %s320 = smul.addr %s319, 2
      %s321 = smul.addr %s320, 4
      %s322 = scalar_lea.vmem %s0, %s321
      %p323 = pneg %p42
      %p324 = pneg %p39
      %p325 = pneg %p63
      %p326 = pneg %p60
      %p327 = pneg %p84
      %p328 = pneg %p81
      %p329 = pneg %p105
      %p330 = pneg %p102
      %p331 = pneg %p126
      %p332 = pneg %p123
      %p333 = pneg %p147
      %p334 = pneg %p144
      %p335 = pneg %p168
      %p336 = pneg %p165
      %p337 = pneg %p189
      %p338 = pneg %p186
      %p339 = pneg %p210
      %p340 = pneg %p207
      %p341 = pneg %p231
      %p342 = pneg %p228
      %p343 = pneg %p257
      %p344 = pneg %p254
      %p345 = scmp.lt.s32.totalorder %s21, 1
      %s346 = scalar_select %p345, %s21, 1
      %s347 = smul.addr %s346, 2
      %s348 = smul.addr %s347, 8
      %s349 = scalar_lea.vmem %s10, %s348
      %p350 = scmp.lt.s32.totalorder %s21, 1
      %s351 = scalar_select %p350, %s21, 1
      %s352 = smul.addr %s351, 2
      %s353 = smul.addr %s352, 4
      %s354 = scalar_lea.vmem %s0, %s353
      %p355 = scmp.lt.s32.totalorder %s21, 1
      %s356 = scalar_select %p355, %s21, 1
      %s357 = smul.addr %s356, 2
      %s358 = smul.addr %s357, 8
      %s359 = scalar_lea.vmem %s10, %s358
      %v360 = vld [vmem:[%s354] sm:$0xff]
      %v361 = vld [vmem:[%s9] sm:$0xff]
      %v362 = vld [vmem:[%s9 + $0x8] sm:$0xff]
      %v363 = vld [vmem:[%s9 + $0x10] sm:$0x1]
      %v364 = vld [vmem:[%s9 + $0x18] sm:$0x1]
      %v365 = vld [vmem:[%s1] sm:$0xff]
      %v366 = vld [vmem:[%s2] sm:$0xff]
      %v368 = vcombine.high %v360, %v360
      %369 = vrot.lane.b32.xlu0 %v360, 4
      %v370 = vpop.permute.xlu0 %369
      %371 = vrot.lane.b32.xlu0 %v368, 4
      %v372 = vpop.permute.xlu0 %371
      %vm373 = vcmask 31744
      %v374 = vsel %vm373, %v370, %v372
      %v377 = vsel %vm373, 0.0, %v370
      %v378 = vlaneseq
      %v379 = vshrl.u32 %v378, 7
      %v380 = vsub.s32 0, %v379
      %v381 = vrot.slane %v361, %v380
      %v382 = vlaneseq
      %v383 = vshrl.u32 %v382, 7
      %v384 = vsub.s32 0, %v383
      %v385 = vrot.slane %v362, %v384
      %v386 = vmul.f32 %v377, %v381
      %v387 = vmul.f32 %v374, %v385
      %388 = vrot.lane.b32.xlu0 %v360, 3
      %v389 = vpop.permute.xlu0 %388
      %390 = vrot.lane.b32.xlu0 %v368, 3
      %v391 = vpop.permute.xlu0 %390
      %vm392 = vcmask 23552
      %v393 = vsel %vm392, %v389, %v391
      %v396 = vsel %vm392, 0.0, %v389
      %v397 = vlaneseq
      %v398 = vshrl.u32 %v397, 7
      %v399 = vsub.s32 1, %v398
      %v400 = vrot.slane %v361, %v399
      %v401 = vlaneseq
      %v402 = vshrl.u32 %v401, 7
      %v403 = vsub.s32 1, %v402
      %v404 = vrot.slane %v362, %v403
      %v405 = vmul.f32 %v396, %v400
      %v406 = vmul.f32 %v393, %v404
      %407 = vrot.lane.b32.xlu0 %v360, 2
      %v408 = vpop.permute.xlu0 %407
      %409 = vrot.lane.b32.xlu0 %v368, 2
      %v410 = vpop.permute.xlu0 %409
      %vm411 = vcmask 15360
      %v412 = vsel %vm411, %v408, %v410
      %v415 = vsel %vm411, 0.0, %v408
      %v416 = vlaneseq
      %v417 = vshrl.u32 %v416, 7
      %v418 = vsub.s32 2, %v417
      %v419 = vrot.slane %v361, %v418
      %v420 = vlaneseq
      %v421 = vshrl.u32 %v420, 7
      %v422 = vsub.s32 2, %v421
      %v423 = vrot.slane %v362, %v422
      %v424 = vmul.f32 %v415, %v419
      %v425 = vmul.f32 %v412, %v423
      %426 = vrot.lane.b32.xlu0 %v360, 1
      %v427 = vpop.permute.xlu0 %426
      %428 = vrot.lane.b32.xlu0 %v368, 1
      %v429 = vpop.permute.xlu0 %428
      %vm430 = vcmask 7168
      %v431 = vsel %vm430, %v427, %v429
      %v434 = vsel %vm430, 0.0, %v427
      %v435 = vlaneseq
      %v436 = vshrl.u32 %v435, 7
      %v437 = vsub.s32 3, %v436
      %v438 = vrot.slane %v361, %v437
      %v439 = vlaneseq
      %v440 = vshrl.u32 %v439, 7
      %v441 = vsub.s32 3, %v440
      %v442 = vrot.slane %v362, %v441
      %v443 = vmul.f32 %v434, %v438
      %v444 = vmul.f32 %v431, %v442
      %v445 = vlaneseq
      %v446 = vshrl.u32 %v445, 7
      %v447 = vsub.s32 4, %v446
      %v448 = vrot.slane %v361, %v447
      %v449 = vlaneseq
      %v450 = vshrl.u32 %v449, 7
      %v451 = vsub.s32 4, %v450
      %v452 = vrot.slane %v362, %v451
      %v455 = vcombine.low %v448, %v452
      %v457 = vmul.f32 %v360, %v455
      %458 = vrot.lane.b32.xlu0 %v360, 127
      %v459 = vpop.permute.xlu0 %458
      %460 = vrot.lane.b32.xlu0 %v368, 127
      %v461 = vpop.permute.xlu0 %460
      %vm462 = vcmask 1039360
      %v463 = vsel %vm462, %v459, %v461
      %v466 = vsel %vm462, %v461, 0.0
      %v467 = vlaneseq
      %v468 = vshrl.u32 %v467, 7
      %v469 = vsub.s32 5, %v468
      %v470 = vrot.slane %v361, %v469
      %v471 = vlaneseq
      %v472 = vshrl.u32 %v471, 7
      %v473 = vsub.s32 5, %v472
      %v474 = vrot.slane %v362, %v473
      %v475 = vmul.f32 %v463, %v470
      %v476 = vmul.f32 %v466, %v474
      %477 = vrot.lane.b32.xlu0 %v360, 126
      %v478 = vpop.permute.xlu0 %477
      %479 = vrot.lane.b32.xlu0 %v368, 126
      %v480 = vpop.permute.xlu0 %479
      %vm481 = vcmask 1031168
      %v482 = vsel %vm481, %v478, %v480
      %v485 = vsel %vm481, %v480, 0.0
      %v486 = vlaneseq
      %v487 = vshrl.u32 %v486, 7
      %v488 = vsub.s32 6, %v487
      %v489 = vrot.slane %v361, %v488
      %v490 = vlaneseq
      %v491 = vshrl.u32 %v490, 7
      %v492 = vsub.s32 6, %v491
      %v493 = vrot.slane %v362, %v492
      %v494 = vmul.f32 %v482, %v489
      %v495 = vmul.f32 %v485, %v493
      %496 = vrot.lane.b32.xlu0 %v360, 125
      %v497 = vpop.permute.xlu0 %496
      %498 = vrot.lane.b32.xlu0 %v368, 125
      %v499 = vpop.permute.xlu0 %498
      %vm500 = vcmask 1022976
      %v501 = vsel %vm500, %v497, %v499
      %v504 = vsel %vm500, %v499, 0.0
      %v505 = vlaneseq
      %v506 = vshrl.u32 %v505, 7
      %v507 = vsub.s32 7, %v506
      %v508 = vrot.slane %v361, %v507
      %v509 = vlaneseq
      %v510 = vshrl.u32 %v509, 7
      %v511 = vsub.s32 7, %v510
      %v512 = vrot.slane %v362, %v511
      %v513 = vmul.f32 %v501, %v508
      %v514 = vmul.f32 %v504, %v512
      %515 = vrot.lane.b32.xlu0 %v360, 124
      %v516 = vpop.permute.xlu0 %515
      %517 = vrot.lane.b32.xlu0 %v368, 124
      %v518 = vpop.permute.xlu0 %517
      %vm519 = vcmask 1014784
      %v520 = vsel %vm519, %v516, %v518
      %v523 = vsel %vm519, %v518, 0.0
      %v524 = vlaneseq
      %v525 = vshrl.u32 %v524, 7
      %v526 = vsub.s32 0, %v525
      %v527 = vrot.slane %v363, %v526
      %v528 = vlaneseq
      %v529 = vshrl.u32 %v528, 7
      %v530 = vsub.s32 0, %v529
      %v531 = vrot.slane %v364, %v530
      %v532 = vmul.f32 %v520, %v527
      %v533 = vmul.f32 %v523, %v531
      %v536 = vrot.slane %v405, 4
      %v537 = vrot.slane %v406, 4
      %v542 = vrot.slane %v443, 4
      %v543 = vrot.slane %v444, 4
      %v547 = vcombine.high %v457, %v457
      %v551 = vrot.slane %v475, 4
      %v552 = vrot.slane %v476, 4
      %v557 = vrot.slane %v513, 4
      %v558 = vrot.slane %v514, 4
      %vm561 = vcmask 1043456
      %v562 = vsel %vm561, %v386, %v536
      %v563 = vsel %vm561, %v387, %v537
      %v564 = vsel %vm561, %v424, %v542
      %v565 = vsel %vm561, %v425, %v543
      %v566 = vsel %vm561, %v457, %v551
      %v567 = vsel %vm561, %v547, %v552
      %v568 = vsel %vm561, %v494, %v557
      %v569 = vsel %vm561, %v495, %v558
      %571 = vset.pattern.permute.xlu0 0
      %572 = vperm.xlu0 %571, %v366
      %v573 = vpop.permute.xlu0 %572
      %vm575 = vcmask 293888
      %v577 = vsel %vm575, %v365, 0
      %v580 = vsel %vm561, %v532, 0
      %v583 = vsel %vm561, %v533, 0
      %585 = vmatprep.subr.mxu0 0.0
      %586 = vmatpush1.msra.mxu0 0.0
      %587 = vmatprep.subr.mxu0 0.0
      %588 = vmatpush1.msra.mxu0 0.0
      %589 = vmatprep.subr.mxu0 0.0
      %590 = vmatpush1.msra.mxu0 0.0
      %591 = vmatprep.subr.mxu0 0.0
      %592 = vmatpush1.msra.mxu0 0.0
      %593 = vmatprep.subr.mxu0 0.0
      %594 = vmatpush1.msra.mxu0 0.0
      %595 = vmatprep.subr.mxu0 0.0
      %596 = vmatpush1.msra.mxu0 0.0
      %597 = vmatprep.subr.mxu0 0.0
      %598 = vmatpush1.msra.mxu0 0.0
      %599 = vmatprep.subr.mxu0 0.0
      %600 = vmatpush1.msra.mxu0 0.0
      %601 = vmatprep.subr.mxu0 0.0
      %602 = vmatpush1.msra.mxu0 0.0
      %603 = vmatprep.subr.mxu0 0.0
      %604 = vmatpush1.msra.mxu0 0.0
      %605 = vmatprep.subr.mxu0 0.0
      %606 = vmatpush1.msra.mxu0 0.0
      %607 = vmatprep.subr.mxu0 %v583
      %608 = vmatpush1.msra.mxu0 %v580
      %609 = vmatprep.subr.mxu0 %v569
      %610 = vmatpush1.msra.mxu0 %v568
      %611 = vmatprep.subr.mxu0 %v567
      %612 = vmatpush1.msra.mxu0 %v566
      %613 = vmatprep.subr.mxu0 %v565
      %614 = vmatpush1.msra.mxu0 %v564
      %615 = vmatprep.subr.mxu0 %v563
      %616 = vmatpush1.msra.mxu0 %v562
      %617 = vmatprep.subr.mxu0 0.0
      %618 = vmatpush2.msra.mxu0 0.0
      %619 = vmatprep.subr.mxu0 0.0
      %620 = vmatpush2.msra.mxu0 0.0
      %621 = vmatprep.subr.mxu0 0.0
      %622 = vmatpush2.msra.mxu0 0.0
      %623 = vmatprep.subr.mxu0 0.0
      %624 = vmatpush2.msra.mxu0 0.0
      %625 = vmatprep.subr.mxu0 0.0
      %626 = vmatpush2.msra.mxu0 0.0
      %627 = vmatprep.subr.mxu0 0.0
      %628 = vmatpush2.msra.mxu0 0.0
      %629 = vmatprep.subr.mxu0 0.0
      %630 = vmatpush2.msra.mxu0 0.0
      %631 = vmatprep.subr.mxu0 0.0
      %632 = vmatpush2.msra.mxu0 0.0
      %633 = vmatprep.subr.mxu0 0.0
      %634 = vmatpush2.msra.mxu0 0.0
      %635 = vmatprep.subr.mxu0 0.0
      %636 = vmatpush2.msra.mxu0 0.0
      %637 = vmatprep.subr.mxu0 0.0
      %638 = vmatpush2.msra.mxu0 0.0
      %639 = vmatprep.subr.mxu0 0.0
      %640 = vmatpush2.msra.mxu0 0.0
      %641 = vmatprep.subr.mxu0 0.0
      %642 = vmatpush2.msra.mxu0 0.0
      %643 = vmatprep.subr.mxu0 0.0
      %644 = vmatpush2.msra.mxu0 0.0
      %645 = vmatprep.subr.mxu0 0.0
      %646 = vmatpush2.msra.mxu0 0.0
      %647 = vmatprep.subr.mxu0 0.0
      %648 = vmatpush2.msra.mxu0 0.0
      %649 = vmatprep.mubr.f32.mxu0 0.0
      %650 = vmatmul.mubr.f32.gmra.mxu0 %v577
      %v651 = vpop.f32.mrf.mxu0
      %v652 = vadd.f32 %v573, %v651
      %v653 = vpop.f32.mrf.mxu0
      %v654 = vadd.f32 %v573, %v653
      %655 = vdwg.mxu0
      %v656 = vld [vmem:[%s3] sm:$0xff]
      %v657 = vld [vmem:[%s4] sm:$0xff]
      %660 = vrot.lane.b32.xlu0 %v652, 64
      %v661 = vpop.permute.xlu0 %660
      %662 = vrot.lane.b32.xlu0 %v654, 64
      %v663 = vpop.permute.xlu0 %662
      %vm664 = vcmask 523264
      %v665 = vsel %vm664, %v661, %v663
      %v668 = vsel %vm664, 0.0, %v661
      %669 = vrot.lane.b32.xlu0 %v652, 48
      %v670 = vpop.permute.xlu0 %669
      %671 = vrot.lane.b32.xlu0 %v654, 48
      %v672 = vpop.permute.xlu0 %671
      %vm673 = vcmask 392192
      %v674 = vsel %vm673, %v670, %v672
      %v677 = vsel %vm673, 0.0, %v670
      %678 = vrot.lane.b32.xlu0 %v652, 32
      %v679 = vpop.permute.xlu0 %678
      %680 = vrot.lane.b32.xlu0 %v654, 32
      %v681 = vpop.permute.xlu0 %680
      %vm682 = vcmask 261120
      %v683 = vsel %vm682, %v679, %v681
      %v686 = vsel %vm682, 0.0, %v679
      %687 = vrot.lane.b32.xlu0 %v652, 16
      %v688 = vpop.permute.xlu0 %687
      %689 = vrot.lane.b32.xlu0 %v654, 16
      %v690 = vpop.permute.xlu0 %689
      %vm691 = vcmask 130048
      %v692 = vsel %vm691, %v688, %v690
      %v695 = vsel %vm691, 0.0, %v688
      %696 = vrot.lane.b32.xlu0 %v652, 112
      %v697 = vpop.permute.xlu0 %696
      %698 = vrot.lane.b32.xlu0 %v654, 112
      %v699 = vpop.permute.xlu0 %698
      %vm700 = vcmask 916480
      %v701 = vsel %vm700, %v697, %v699
      %v704 = vsel %vm700, %v699, 0.0
      %705 = vrot.lane.b32.xlu0 %v652, 96
      %v706 = vpop.permute.xlu0 %705
      %707 = vrot.lane.b32.xlu0 %v654, 96
      %v708 = vpop.permute.xlu0 %707
      %vm709 = vcmask 785408
      %v710 = vsel %vm709, %v706, %v708
      %v713 = vsel %vm709, %v708, 0.0
      %714 = vrot.lane.b32.xlu0 %v652, 80
      %v715 = vpop.permute.xlu0 %714
      %716 = vrot.lane.b32.xlu0 %v654, 80
      %v717 = vpop.permute.xlu0 %716
      %vm718 = vcmask 654336
      %v719 = vsel %vm718, %v715, %v717
      %v722 = vsel %vm718, %v717, 0.0
      %v724 = vsel %vm664, %v663, 0.0
      %726 = vset.pattern.permute.xlu0 0
      %727 = vperm.xlu0 %726, %v657
      %v728 = vpop.permute.xlu0 %727
      %vm730 = vcmask 588800
      %v732 = vsel %vm730, %v656, 0
      %734 = vmatprep.subr.mxu0 0.0
      %735 = vmatpush1.msra.mxu0 0.0
      %736 = vmatprep.subr.mxu0 0.0
      %737 = vmatpush1.msra.mxu0 0.0
      %738 = vmatprep.subr.mxu0 0.0
      %739 = vmatpush1.msra.mxu0 0.0
      %740 = vmatprep.subr.mxu0 0.0
      %741 = vmatpush1.msra.mxu0 0.0
      %742 = vmatprep.subr.mxu0 0.0
      %743 = vmatpush1.msra.mxu0 0.0
      %744 = vmatprep.subr.mxu0 0.0
      %745 = vmatpush1.msra.mxu0 0.0
      %746 = vmatprep.subr.mxu0 0.0
      %747 = vmatpush1.msra.mxu0 0.0
      %748 = vmatprep.subr.mxu0 %v724
      %749 = vmatpush1.msra.mxu0 %v665
      %750 = vmatprep.subr.mxu0 %v722
      %751 = vmatpush1.msra.mxu0 %v719
      %752 = vmatprep.subr.mxu0 %v713
      %753 = vmatpush1.msra.mxu0 %v710
      %754 = vmatprep.subr.mxu0 %v704
      %755 = vmatpush1.msra.mxu0 %v701
      %756 = vmatprep.subr.mxu0 %v654
      %757 = vmatpush1.msra.mxu0 %v652
      %758 = vmatprep.subr.mxu0 %v692
      %759 = vmatpush1.msra.mxu0 %v695
      %760 = vmatprep.subr.mxu0 %v683
      %761 = vmatpush1.msra.mxu0 %v686
      %762 = vmatprep.subr.mxu0 %v674
      %763 = vmatpush1.msra.mxu0 %v677
      %764 = vmatprep.subr.mxu0 %v665
      %765 = vmatpush1.msra.mxu0 %v668
      %766 = vmatprep.subr.mxu0 0.0
      %767 = vmatpush2.msra.mxu0 0.0
      %768 = vmatprep.subr.mxu0 0.0
      %769 = vmatpush2.msra.mxu0 0.0
      %770 = vmatprep.subr.mxu0 0.0
      %771 = vmatpush2.msra.mxu0 0.0
      %772 = vmatprep.subr.mxu0 0.0
      %773 = vmatpush2.msra.mxu0 0.0
      %774 = vmatprep.subr.mxu0 0.0
      %775 = vmatpush2.msra.mxu0 0.0
      %776 = vmatprep.subr.mxu0 0.0
      %777 = vmatpush2.msra.mxu0 0.0
      %778 = vmatprep.subr.mxu0 0.0
      %779 = vmatpush2.msra.mxu0 0.0
      %780 = vmatprep.subr.mxu0 0.0
      %781 = vmatpush2.msra.mxu0 0.0
      %782 = vmatprep.subr.mxu0 0.0
      %783 = vmatpush2.msra.mxu0 0.0
      %784 = vmatprep.subr.mxu0 0.0
      %785 = vmatpush2.msra.mxu0 0.0
      %786 = vmatprep.subr.mxu0 0.0
      %787 = vmatpush2.msra.mxu0 0.0
      %788 = vmatprep.subr.mxu0 0.0
      %789 = vmatpush2.msra.mxu0 0.0
      %790 = vmatprep.subr.mxu0 0.0
      %791 = vmatpush2.msra.mxu0 0.0
      %792 = vmatprep.subr.mxu0 0.0
      %793 = vmatpush2.msra.mxu0 0.0
      %794 = vmatprep.subr.mxu0 0.0
      %795 = vmatpush2.msra.mxu0 0.0
      %796 = vmatprep.subr.mxu0 0.0
      %797 = vmatpush2.msra.mxu0 0.0
      %798 = vmatprep.mubr.f32.mxu0 0.0
      %799 = vmatmul.mubr.f32.gmra.mxu0 %v732
      %v800 = vpop.f32.mrf.mxu0
      %v801 = vadd.f32 %v728, %v800
      %v802 = vpop.f32.mrf.mxu0
      %v803 = vadd.f32 %v728, %v802
      %804 = vdwg.mxu0
      %v805 = vld [vmem:[%s5] sm:$0xff]
      %v806 = vld [vmem:[%s6] sm:$0xff]
      %807 = vrot.lane.b32.xlu0 %v360, 64
      %v808 = vpop.permute.xlu0 %807
      %809 = vrot.lane.b32.xlu0 %v368, 64
      %v810 = vpop.permute.xlu0 %809
      %v811 = vsel %vm664, %v808, %v810
      %v814 = vsel %vm664, 0.0, %v808
      %815 = vrot.lane.b32.xlu0 %v360, 48
      %v816 = vpop.permute.xlu0 %815
      %817 = vrot.lane.b32.xlu0 %v368, 48
      %v818 = vpop.permute.xlu0 %817
      %v819 = vsel %vm673, %v816, %v818
      %v821 = vsel %vm673, 0.0, %v816
      %822 = vrot.lane.b32.xlu0 %v360, 32
      %v823 = vpop.permute.xlu0 %822
      %824 = vrot.lane.b32.xlu0 %v368, 32
      %v825 = vpop.permute.xlu0 %824
      %v826 = vsel %vm682, %v823, %v825
      %v829 = vsel %vm682, 0.0, %v823
      %830 = vrot.lane.b32.xlu0 %v360, 16
      %v831 = vpop.permute.xlu0 %830
      %832 = vrot.lane.b32.xlu0 %v368, 16
      %v833 = vpop.permute.xlu0 %832
      %v834 = vsel %vm691, %v831, %v833
      %v836 = vsel %vm691, 0.0, %v831
      %837 = vrot.lane.b32.xlu0 %v360, 112
      %v838 = vpop.permute.xlu0 %837
      %839 = vrot.lane.b32.xlu0 %v368, 112
      %v840 = vpop.permute.xlu0 %839
      %v841 = vsel %vm700, %v838, %v840
      %v843 = vsel %vm700, %v840, 0.0
      %844 = vrot.lane.b32.xlu0 %v360, 96
      %v845 = vpop.permute.xlu0 %844
      %846 = vrot.lane.b32.xlu0 %v368, 96
      %v847 = vpop.permute.xlu0 %846
      %v848 = vsel %vm709, %v845, %v847
      %v851 = vsel %vm709, %v847, 0.0
      %852 = vrot.lane.b32.xlu0 %v360, 80
      %v853 = vpop.permute.xlu0 %852
      %854 = vrot.lane.b32.xlu0 %v368, 80
      %v855 = vpop.permute.xlu0 %854
      %v856 = vsel %vm718, %v853, %v855
      %v858 = vsel %vm718, %v855, 0.0
      %v860 = vsel %vm664, %v810, 0.0
      %v862 = vrot.slane %v821, 4
      %v863 = vrot.slane %v819, 4
      %v867 = vrot.slane %v836, 4
      %v868 = vrot.slane %v834, 4
      %v873 = vrot.slane %v841, 4
      %v874 = vrot.slane %v843, 4
      %v878 = vrot.slane %v856, 4
      %v879 = vrot.slane %v858, 4
      %v882 = vsel %vm561, %v814, %v862
      %v883 = vsel %vm561, %v811, %v863
      %v884 = vsel %vm561, %v829, %v867
      %v885 = vsel %vm561, %v826, %v868
      %v886 = vsel %vm561, %v360, %v873
      %v887 = vsel %vm561, %v368, %v874
      %v888 = vsel %vm561, %v848, %v878
      %v889 = vsel %vm561, %v851, %v879
      %891 = vset.pattern.permute.xlu0 0
      %892 = vperm.xlu0 %891, %v806
      %v893 = vpop.permute.xlu0 %892
      %v896 = vsel %vm575, %v805, 0
      %v898 = vsel %vm561, %v811, 0
      %v901 = vsel %vm561, %v860, 0
      %903 = vmatprep.subr.mxu0 0.0
      %904 = vmatpush1.msra.mxu0 0.0
      %905 = vmatprep.subr.mxu0 0.0
      %906 = vmatpush1.msra.mxu0 0.0
      %907 = vmatprep.subr.mxu0 0.0
      %908 = vmatpush1.msra.mxu0 0.0
      %909 = vmatprep.subr.mxu0 0.0
      %910 = vmatpush1.msra.mxu0 0.0
      %911 = vmatprep.subr.mxu0 0.0
      %912 = vmatpush1.msra.mxu0 0.0
      %913 = vmatprep.subr.mxu0 0.0
      %914 = vmatpush1.msra.mxu0 0.0
      %915 = vmatprep.subr.mxu0 0.0
      %916 = vmatpush1.msra.mxu0 0.0
      %917 = vmatprep.subr.mxu0 0.0
      %918 = vmatpush1.msra.mxu0 0.0
      %919 = vmatprep.subr.mxu0 0.0
      %920 = vmatpush1.msra.mxu0 0.0
      %921 = vmatprep.subr.mxu0 0.0
      %922 = vmatpush1.msra.mxu0 0.0
      %923 = vmatprep.subr.mxu0 0.0
      %924 = vmatpush1.msra.mxu0 0.0
      %925 = vmatprep.subr.mxu0 %v901
      %926 = vmatpush1.msra.mxu0 %v898
      %927 = vmatprep.subr.mxu0 %v889
      %928 = vmatpush1.msra.mxu0 %v888
      %929 = vmatprep.subr.mxu0 %v887
      %930 = vmatpush1.msra.mxu0 %v886
      %931 = vmatprep.subr.mxu0 %v885
      %932 = vmatpush1.msra.mxu0 %v884
      %933 = vmatprep.subr.mxu0 %v883
      %934 = vmatpush1.msra.mxu0 %v882
      %935 = vmatprep.subr.mxu0 0.0
      %936 = vmatpush2.msra.mxu0 0.0
      %937 = vmatprep.subr.mxu0 0.0
      %938 = vmatpush2.msra.mxu0 0.0
      %939 = vmatprep.subr.mxu0 0.0
      %940 = vmatpush2.msra.mxu0 0.0
      %941 = vmatprep.subr.mxu0 0.0
      %942 = vmatpush2.msra.mxu0 0.0
      %943 = vmatprep.subr.mxu0 0.0
      %944 = vmatpush2.msra.mxu0 0.0
      %945 = vmatprep.subr.mxu0 0.0
      %946 = vmatpush2.msra.mxu0 0.0
      %947 = vmatprep.subr.mxu0 0.0
      %948 = vmatpush2.msra.mxu0 0.0
      %949 = vmatprep.subr.mxu0 0.0
      %950 = vmatpush2.msra.mxu0 0.0
      %951 = vmatprep.subr.mxu0 0.0
      %952 = vmatpush2.msra.mxu0 0.0
      %953 = vmatprep.subr.mxu0 0.0
      %954 = vmatpush2.msra.mxu0 0.0
      %955 = vmatprep.subr.mxu0 0.0
      %956 = vmatpush2.msra.mxu0 0.0
      %957 = vmatprep.subr.mxu0 0.0
      %958 = vmatpush2.msra.mxu0 0.0
      %959 = vmatprep.subr.mxu0 0.0
      %960 = vmatpush2.msra.mxu0 0.0
      %961 = vmatprep.subr.mxu0 0.0
      %962 = vmatpush2.msra.mxu0 0.0
      %963 = vmatprep.subr.mxu0 0.0
      %964 = vmatpush2.msra.mxu0 0.0
      %965 = vmatprep.subr.mxu0 0.0
      %966 = vmatpush2.msra.mxu0 0.0
      %967 = vmatprep.mubr.f32.mxu0 0.0
      %968 = vmatmul.mubr.f32.gmra.mxu0 %v896
      %v969 = vpop.f32.mrf.mxu0
      %v970 = vadd.f32 %v893, %v969
      %v971 = vpop.f32.mrf.mxu0
      %v972 = vadd.f32 %v893, %v971
      %973 = vdwg.mxu0
      %v974 = vld [vmem:[%s7] sm:$0xff]
      %v975 = vld [vmem:[%s8] sm:$0xff]
      %978 = vrot.lane.b32.xlu0 %v970, 4
      %v979 = vpop.permute.xlu0 %978
      %980 = vrot.lane.b32.xlu0 %v972, 4
      %v981 = vpop.permute.xlu0 %980
      %v982 = vsel %vm373, %v979, %v981
      %v985 = vsel %vm373, 0.0, %v979
      %v986 = vmul.f32 %v985, %v381
      %v987 = vmul.f32 %v982, %v385
      %988 = vrot.lane.b32.xlu0 %v970, 3
      %v989 = vpop.permute.xlu0 %988
      %990 = vrot.lane.b32.xlu0 %v972, 3
      %v991 = vpop.permute.xlu0 %990
      %v992 = vsel %vm392, %v989, %v991
      %v995 = vsel %vm392, 0.0, %v989
      %v996 = vmul.f32 %v995, %v400
      %v997 = vmul.f32 %v992, %v404
      %998 = vrot.lane.b32.xlu0 %v970, 2
      %v999 = vpop.permute.xlu0 %998
      %1000 = vrot.lane.b32.xlu0 %v972, 2
      %v1001 = vpop.permute.xlu0 %1000
      %v1002 = vsel %vm411, %v999, %v1001
      %v1005 = vsel %vm411, 0.0, %v999
      %v1006 = vmul.f32 %v1005, %v419
      %v1007 = vmul.f32 %v1002, %v423
      %1008 = vrot.lane.b32.xlu0 %v970, 1
      %v1009 = vpop.permute.xlu0 %1008
      %1010 = vrot.lane.b32.xlu0 %v972, 1
      %v1011 = vpop.permute.xlu0 %1010
      %v1012 = vsel %vm430, %v1009, %v1011
      %v1015 = vsel %vm430, 0.0, %v1009
      %v1016 = vmul.f32 %v1015, %v438
      %v1017 = vmul.f32 %v1012, %v442
      %v1018 = vmul.f32 %v970, %v448
      %v1019 = vmul.f32 %v972, %v452
      %1020 = vrot.lane.b32.xlu0 %v970, 127
      %v1021 = vpop.permute.xlu0 %1020
      %1022 = vrot.lane.b32.xlu0 %v972, 127
      %v1023 = vpop.permute.xlu0 %1022
      %v1024 = vsel %vm462, %v1021, %v1023
      %v1027 = vsel %vm462, %v1023, 0.0
      %v1028 = vmul.f32 %v1024, %v470
      %v1029 = vmul.f32 %v1027, %v474
      %1030 = vrot.lane.b32.xlu0 %v970, 126
      %v1031 = vpop.permute.xlu0 %1030
      %1032 = vrot.lane.b32.xlu0 %v972, 126
      %v1033 = vpop.permute.xlu0 %1032
      %v1034 = vsel %vm481, %v1031, %v1033
      %v1037 = vsel %vm481, %v1033, 0.0
      %v1038 = vmul.f32 %v1034, %v489
      %v1039 = vmul.f32 %v1037, %v493
      %1040 = vrot.lane.b32.xlu0 %v970, 125
      %v1041 = vpop.permute.xlu0 %1040
      %1042 = vrot.lane.b32.xlu0 %v972, 125
      %v1043 = vpop.permute.xlu0 %1042
      %v1044 = vsel %vm500, %v1041, %v1043
      %v1047 = vsel %vm500, %v1043, 0.0
      %v1048 = vmul.f32 %v1044, %v508
      %v1049 = vmul.f32 %v1047, %v512
      %1050 = vrot.lane.b32.xlu0 %v970, 124
      %v1051 = vpop.permute.xlu0 %1050
      %1052 = vrot.lane.b32.xlu0 %v972, 124
      %v1053 = vpop.permute.xlu0 %1052
      %v1054 = vsel %vm519, %v1051, %v1053
      %v1057 = vsel %vm519, %v1053, 0.0
      %v1058 = vmul.f32 %v1054, %v527
      %v1059 = vmul.f32 %v1057, %v531
      %1061 = vset.pattern.permute.xlu0 0
      %1062 = vperm.xlu0 %1061, %v975
      %v1063 = vpop.permute.xlu0 %1062
      %v1066 = vsel %vm730, %v974, 0
      %1068 = vmatprep.subr.mxu0 0.0
      %1069 = vmatpush1.msra.mxu0 0.0
      %1070 = vmatprep.subr.mxu0 0.0
      %1071 = vmatpush1.msra.mxu0 0.0
      %1072 = vmatprep.subr.mxu0 0.0
      %1073 = vmatpush1.msra.mxu0 0.0
      %1074 = vmatprep.subr.mxu0 0.0
      %1075 = vmatpush1.msra.mxu0 0.0
      %1076 = vmatprep.subr.mxu0 0.0
      %1077 = vmatpush1.msra.mxu0 0.0
      %1078 = vmatprep.subr.mxu0 0.0
      %1079 = vmatpush1.msra.mxu0 0.0
      %1080 = vmatprep.subr.mxu0 0.0
      %1081 = vmatpush1.msra.mxu0 0.0
      %1082 = vmatprep.subr.mxu0 %v1059
      %1083 = vmatpush1.msra.mxu0 %v1058
      %1084 = vmatprep.subr.mxu0 %v1049
      %1085 = vmatpush1.msra.mxu0 %v1048
      %1086 = vmatprep.subr.mxu0 %v1039
      %1087 = vmatpush1.msra.mxu0 %v1038
      %1088 = vmatprep.subr.mxu0 %v1029
      %1089 = vmatpush1.msra.mxu0 %v1028
      %1090 = vmatprep.subr.mxu0 %v1019
      %1091 = vmatpush1.msra.mxu0 %v1018
      %1092 = vmatprep.subr.mxu0 %v1017
      %1093 = vmatpush1.msra.mxu0 %v1016
      %1094 = vmatprep.subr.mxu0 %v1007
      %1095 = vmatpush1.msra.mxu0 %v1006
      %1096 = vmatprep.subr.mxu0 %v997
      %1097 = vmatpush1.msra.mxu0 %v996
      %1098 = vmatprep.subr.mxu0 %v987
      %1099 = vmatpush1.msra.mxu0 %v986
      %1100 = vmatprep.subr.mxu0 0.0
      %1101 = vmatpush2.msra.mxu0 0.0
      %1102 = vmatprep.subr.mxu0 0.0
      %1103 = vmatpush2.msra.mxu0 0.0
      %1104 = vmatprep.subr.mxu0 0.0
      %1105 = vmatpush2.msra.mxu0 0.0
      %1106 = vmatprep.subr.mxu0 0.0
      %1107 = vmatpush2.msra.mxu0 0.0
      %1108 = vmatprep.subr.mxu0 0.0
      %1109 = vmatpush2.msra.mxu0 0.0
      %1110 = vmatprep.subr.mxu0 0.0
      %1111 = vmatpush2.msra.mxu0 0.0
      %1112 = vmatprep.subr.mxu0 0.0
      %1113 = vmatpush2.msra.mxu0 0.0
      %1114 = vmatprep.subr.mxu0 0.0
      %1115 = vmatpush2.msra.mxu0 0.0
      %1116 = vmatprep.subr.mxu0 0.0
      %1117 = vmatpush2.msra.mxu0 0.0
      %1118 = vmatprep.subr.mxu0 0.0
      %1119 = vmatpush2.msra.mxu0 0.0
      %1120 = vmatprep.subr.mxu0 0.0
      %1121 = vmatpush2.msra.mxu0 0.0
      %1122 = vmatprep.subr.mxu0 0.0
      %1123 = vmatpush2.msra.mxu0 0.0
      %1124 = vmatprep.subr.mxu0 0.0
      %1125 = vmatpush2.msra.mxu0 0.0
      %1126 = vmatprep.subr.mxu0 0.0
      %1127 = vmatpush2.msra.mxu0 0.0
      %1128 = vmatprep.subr.mxu0 0.0
      %1129 = vmatpush2.msra.mxu0 0.0
      %1130 = vmatprep.subr.mxu0 0.0
      %1131 = vmatpush2.msra.mxu0 0.0
      %1132 = vmatprep.mubr.f32.mxu0 0.0
      %1133 = vmatmul.mubr.f32.gmra.mxu0 %v1066
      %v1134 = vpop.f32.mrf.mxu0
      %v1135 = vadd.f32 %v1063, %v1134
      %v1136 = vpop.f32.mrf.mxu0
      %v1137 = vadd.f32 %v1063, %v1136
      %1138 = vdwg.mxu0
      %v1139 = vadd.f32 %v801, %v1135
      %v1140 = vadd.f32 %v803, %v1137
      %1141 = vst [vmem:[%s359] sm:$0xff] %v1139
      %1142 = vst [vmem:[%s359 + $0x8] sm:$0xff] %v1140
      %p1143 = scmp.lt.s32.totalorder %s21, 1
      %s1144 = scalar_select %p1143, %s21, 1
      %s1145 = smul.addr %s1144, 2
      %s1146 = smul.addr %s1145, 8
      %s1147 = scalar_lea.vmem %s10, %s1146
      // Predicated region
      $region61: #{gcn_forward.1} parent=59 // pred_check
        %p1148 = pneg %p254
      $region62: #{gcn_forward.1} parent=59 // pred_check_branch
        %1150 = sbr.rel (%p1148) target = $region64
      $region63: #{gcn_forward.1} parent=59 // pred_region
        _
      $region64: #{gcn_forward.1} parent=59 // pred_fallthru
        _
    $region60: #{gcn_forward.1} parent=5 // pred_fallthru
      _
    %p1151 = scmp.le.s32.totalorder 2, %s16
    // Predicated region
    $region65: #{gcn_forward.1} parent=5 // pred_check
      %p1152 = pneg %p1151
    $region66: #{gcn_forward.1} parent=5 // pred_check_branch
      %1154 = sbr.rel (%p1152) target = $region68
    $region67: #{gcn_forward.1} parent=5 // pred_region
      %s1155 = ssub.s32 %s16, 2
      // Predicated region
      $region69: #{gcn_forward.1} parent=67 // pred_check
        %p1156 = pneg %p260
      $region70: #{gcn_forward.1} parent=67 // pred_check_branch
        %1158 = sbr.rel (%p1156) target = $region72
      $region71: #{gcn_forward.1} parent=67 // pred_region
        %p1159 = scmp.lt.s32.totalorder %s22, 1
        %s1160 = scalar_select %p1159, %s22, 1
        %s1161 = smul.addr %s1160, 2
        %s1162 = smul.addr %s1161, 8
        %s1163 = scalar_lea.vmem %s10, %s1162
      $region72: #{gcn_forward.1} parent=67 // pred_fallthru
        _
    $region68: #{gcn_forward.1} parent=5 // pred_fallthru
      _
  $region6: #{gcn_forward.1} parent=0 // loop_footer
    %s20 = sadd.s32 1, %s16
  $region7: #{gcn_forward.1} parent=0 // loop_footer_branch
    %15 = sbr.rel target = $region3
  $region8: #{gcn_forward.1} parent=0 // loop_exit
    _

</llo_original>
